<compile_context>
chip_gen: v6e
topology: v6e:2x2x1
jax: 0.10.0
libtpu: 0.0.40
codegen_flags: <defaults>
</compile_context>

<pallas_src>
import functools

import jax
import jax.numpy as jnp
from jax.experimental import pallas as pl
from jax.experimental.pallas import tpu as pltpu


def _round_up(x, m):
    return (x + m - 1) // m * m


# ---------------------------------------------------------------------------
# Pallas kernel: fused im2col (static lane-offset slices) + 3x3 conv as nine
# accumulated matmuls + bias + ReLU.
#   x_ref : (C, P_in)   bf16  -- zero-padded image pixels flattened as (n, i, j)
#   w_ref : (K*K, O, C) bf16  -- per-tap weight matrices
#   b_ref : (O, 1)      f32
#   o_ref : (O, P_out)  f32   -- lane-dense output (P_out % 128 == 0)
# ---------------------------------------------------------------------------
def _conv3x3_relu_kernel(x_ref, w_ref, b_ref, o_ref, *, k, wp, p_out):
    acc = jnp.zeros(o_ref.shape, jnp.float32)
    for dh in range(k):                              # static unroll: 9 taps
        for dw in range(k):
            off = dh * wp + dw                       # static lane offset of this tap
            xs = x_ref[:, off:off + p_out]           # (C, P_out) bf16
            w_tap = w_ref[dh * k + dw]               # (O, C) bf16
            acc += jnp.dot(w_tap, xs, preferred_element_type=jnp.float32)
    o_ref[...] = jnp.maximum(acc + b_ref[...], 0.0)  # bias + ReLU on f32 accumulator


def conv3x3_relu_pallas(x, weight, bias):
    """x: (N,C,H,W) f32; weight: (O,C,3,3) f32; bias: (O,) f32 -> (N,O,H,W) f32."""
    N, C, H, W = x.shape
    O, _, K, _ = weight.shape
    pad = K // 2
    HP, WP = H + 2 * pad, W + 2 * pad
    P_raw = N * HP * WP                                  # flattened padded pixels
    P_out = _round_up(P_raw, 128)                        # lane-dense output width
    max_off = (K - 1) * WP + (K - 1)                     # largest tap shift
    P_in = _round_up(P_out + max_off, 128)

    # Host glue (cheap, ~1.3x input bytes): pad spatially, channels-first flatten,
    # pad pixel axis, cast to bf16 for the MXU.
    xp = jnp.pad(x, ((0, 0), (0, 0), (pad, pad), (pad, pad)))            # (N,C,HP,WP)
    xf = jnp.transpose(xp, (1, 0, 2, 3)).reshape(C, P_raw)               # (C, P_raw)
    xf = jnp.pad(xf, ((0, 0), (0, P_in - P_raw))).astype(jnp.bfloat16)   # (C, P_in)

    w_taps = jnp.transpose(weight, (2, 3, 0, 1)).reshape(K * K, O, C)    # (9, O, C)
    w_taps = w_taps.astype(jnp.bfloat16)
    b2d = bias.reshape(O, 1).astype(jnp.float32)

    kernel = functools.partial(_conv3x3_relu_kernel, k=K, wp=WP, p_out=P_out)
    out_big = pl.pallas_call(
        kernel,
        out_shape=jax.ShapeDtypeStruct((O, P_out), jnp.float32),
        grid_spec=pltpu.PrefetchScalarGridSpec(
            num_scalar_prefetch=0,
            grid=(1,),                                   # whole problem resident
            in_specs=[
                pl.BlockSpec((C, P_in), lambda i: (0, 0)),
                pl.BlockSpec((K * K, O, C), lambda i: (0, 0, 0)),
                pl.BlockSpec((O, 1), lambda i: (0, 0)),
            ],
            out_specs=pl.BlockSpec((O, P_out), lambda i: (0, 0)),
        ),
        compiler_params=pltpu.CompilerParams(
            dimension_semantics=("arbitrary",),
        ),
    )(xf, w_taps, b2d)

    # Gather valid output pixels: (O, P_out) -> (O, N, HP, WP)[..., :H, :W] -> NCHW.
    out = out_big[:, :P_raw].reshape(O, N, HP, WP)[:, :, :H, :W]
    return jnp.transpose(out, (1, 0, 2, 3))


class JaxConvReluModule:
    """The 'wrapped module': Conv2d(Cin, Cout, 3, padding=1) + ReLU, NCHW in/out."""

    def __init__(self, cin, cout, k=3, key=jax.random.PRNGKey(0)):
        kw, kb = jax.random.split(key)
        fan_in = cin * k * k
        bound = 1.0 / jnp.sqrt(jnp.float32(fan_in))
        # PyTorch conv weight layout: (Cout, Cin, kH, kW)
        self.weight = jax.random.uniform(
            kw, (cout, cin, k, k), jnp.float32, -bound, bound)
        self.bias = jax.random.uniform(kb, (cout,), jnp.float32, -bound, bound)
        self.k = k

    def __call__(self, x):
        return conv3x3_relu_pallas(x, self.weight, self.bias)


class ModelWrapper:
    """JAX port of the PyTorch ModelWrapper: wraps module output in {'pred': ...}."""

    def __init__(self, module, is_jit_model: bool = False):
        self.module = module
        self.is_jit_model = is_jit_model

    def __call__(self, *args, **kwargs):
        output = self.module(*args, **kwargs)
        if isinstance(output, dict):
            return output
        if self.is_jit_model and isinstance(output, tuple):
            output, _ = output
        return {"pred": output}


if __name__ == "__main__":
    key = jax.random.PRNGKey(0)
    kx, kp = jax.random.split(key)

    N, C, H, W = 2, 4, 16, 16        # x: NCHW
    COUT = 8
    x = jax.random.normal(kx, (N, C, H, W), jnp.float32)

    inner = JaxConvReluModule(C, COUT, k=3, key=kp)
    model = ModelWrapper(inner)

    fwd = jax.jit(lambda xi: model(xi))   # fuse host-side layout glue into one XLA program
    out = fwd(x)
    pred = jax.block_until_ready(out["pred"])
    assert pred.shape == (N, COUT, H, W), pred.shape

    def conv_ref(xi, wi):
        y = jax.lax.conv_general_dilated(
            xi, wi, window_strides=(1, 1), padding="SAME",
            dimension_numbers=("NCHW", "OIHW", "NCHW"),
            precision=jax.lax.Precision.HIGHEST)
        return jnp.maximum(y + inner.bias.reshape(1, COUT, 1, 1), 0.0)

    # Tight check: same bf16-quantized operands, f32 math (kernel products are exact
    # in f32, so only accumulation-order noise remains).
    ref_q = conv_ref(x.astype(jnp.bfloat16).astype(jnp.float32),
                     inner.weight.astype(jnp.bfloat16).astype(jnp.float32))
    assert jnp.allclose(pred, ref_q, atol=1e-3, rtol=1e-3)

    # Sanity check vs the pure-f32 module semantics (bf16 input quantization ~4e-3).
    ref = conv_ref(x, inner.weight)
    assert jnp.allclose(pred, ref, atol=3e-2, rtol=3e-2)

    print("KERNEL_OK")
</pallas_src>

<mosaic_0001>
module attributes {stable_mosaic.version = 11 : i64} {
  func.func @_conv3x3_relu_kernel(%arg0: i32, %arg1: memref<4x896xbf16, #tpu.memory_space<vmem>>, %arg2: memref<9x8x4xbf16, #tpu.memory_space<vmem>>, %arg3: memref<8x1xf32, #tpu.memory_space<vmem>>, %arg4: memref<8x768xf32, #tpu.memory_space<vmem>>) attributes {dimension_semantics = [#tpu.dimension_semantics<arbitrary>], iteration_bounds = array<i64: 1>, scalar_prefetch = 0 : i64, scratch_operands = 0 : i64, tpu.core_type = #tpu.core_type<tc>, window_params = [{pipeline_mode = #tpu.pipeline_mode<synchronous>, transform_indices = @transform_0, window_bounds = array<i64: 4, 896>}, {pipeline_mode = #tpu.pipeline_mode<synchronous>, transform_indices = @transform_1, window_bounds = array<i64: 9, 8, 4>}, {pipeline_mode = #tpu.pipeline_mode<synchronous>, transform_indices = @transform_2, window_bounds = array<i64: 8, 1>}, {pipeline_mode = #tpu.pipeline_mode<synchronous>, transform_indices = @transform_3, window_bounds = array<i64: 8, 768>}]} {
    %cst = arith.constant 0.000000e+00 : f32
    %0 = vector.broadcast %cst : f32 to vector<8x768xf32>
    %c0 = arith.constant 0 : index
    %c0_0 = arith.constant 0 : index
    %1 = vector.load %arg1[%c0, %c0_0] : memref<4x896xbf16, #tpu.memory_space<vmem>>, vector<4x768xbf16>
    %c0_1 = arith.constant 0 : index
    %c0_2 = arith.constant 0 : index
    %c0_3 = arith.constant 0 : index
    %2 = vector.load %arg2[%c0_1, %c0_2, %c0_3] : memref<9x8x4xbf16, #tpu.memory_space<vmem>>, vector<1x8x4xbf16>
    %3 = vector.shape_cast %2 : vector<1x8x4xbf16> to vector<8x4xbf16>
    %cst_4 = arith.constant dense<0.000000e+00> : vector<8x768xf32>
    %4 = tpu.matmul %3, %1, %cst_4 {dimension_numbers = #tpu.dot_dimension_numbers<[1], [0], [0], [1], [0, 0, 1, 1], [], []>} : vector<8x4xbf16>, vector<4x768xbf16>, vector<8x768xf32> -> vector<8x768xf32>
    %5 = arith.addf %0, %4 : vector<8x768xf32>
    %c0_5 = arith.constant 0 : index
    %c1 = arith.constant 1 : index
    %6 = vector.load %arg1[%c0_5, %c1] : memref<4x896xbf16, #tpu.memory_space<vmem>>, vector<4x768xbf16>
    %c1_6 = arith.constant 1 : index
    %c0_7 = arith.constant 0 : index
    %c0_8 = arith.constant 0 : index
    %7 = vector.load %arg2[%c1_6, %c0_7, %c0_8] : memref<9x8x4xbf16, #tpu.memory_space<vmem>>, vector<1x8x4xbf16>
    %8 = vector.shape_cast %7 : vector<1x8x4xbf16> to vector<8x4xbf16>
    %cst_9 = arith.constant dense<0.000000e+00> : vector<8x768xf32>
    %9 = tpu.matmul %8, %6, %cst_9 {dimension_numbers = #tpu.dot_dimension_numbers<[1], [0], [0], [1], [0, 0, 1, 1], [], []>} : vector<8x4xbf16>, vector<4x768xbf16>, vector<8x768xf32> -> vector<8x768xf32>
    %10 = arith.addf %5, %9 : vector<8x768xf32>
    %c0_10 = arith.constant 0 : index
    %c2 = arith.constant 2 : index
    %11 = vector.load %arg1[%c0_10, %c2] : memref<4x896xbf16, #tpu.memory_space<vmem>>, vector<4x768xbf16>
    %c2_11 = arith.constant 2 : index
    %c0_12 = arith.constant 0 : index
    %c0_13 = arith.constant 0 : index
    %12 = vector.load %arg2[%c2_11, %c0_12, %c0_13] : memref<9x8x4xbf16, #tpu.memory_space<vmem>>, vector<1x8x4xbf16>
    %13 = vector.shape_cast %12 : vector<1x8x4xbf16> to vector<8x4xbf16>
    %cst_14 = arith.constant dense<0.000000e+00> : vector<8x768xf32>
    %14 = tpu.matmul %13, %11, %cst_14 {dimension_numbers = #tpu.dot_dimension_numbers<[1], [0], [0], [1], [0, 0, 1, 1], [], []>} : vector<8x4xbf16>, vector<4x768xbf16>, vector<8x768xf32> -> vector<8x768xf32>
    %15 = arith.addf %10, %14 : vector<8x768xf32>
    %c0_15 = arith.constant 0 : index
    %c18 = arith.constant 18 : index
    %16 = vector.load %arg1[%c0_15, %c18] : memref<4x896xbf16, #tpu.memory_space<vmem>>, vector<4x768xbf16>
    %c3 = arith.constant 3 : index
    %c0_16 = arith.constant 0 : index
    %c0_17 = arith.constant 0 : index
    %17 = vector.load %arg2[%c3, %c0_16, %c0_17] : memref<9x8x4xbf16, #tpu.memory_space<vmem>>, vector<1x8x4xbf16>
    %18 = vector.shape_cast %17 : vector<1x8x4xbf16> to vector<8x4xbf16>
    %cst_18 = arith.constant dense<0.000000e+00> : vector<8x768xf32>
    %19 = tpu.matmul %18, %16, %cst_18 {dimension_numbers = #tpu.dot_dimension_numbers<[1], [0], [0], [1], [0, 0, 1, 1], [], []>} : vector<8x4xbf16>, vector<4x768xbf16>, vector<8x768xf32> -> vector<8x768xf32>
    %20 = arith.addf %15, %19 : vector<8x768xf32>
    %c0_19 = arith.constant 0 : index
    %c19 = arith.constant 19 : index
    %21 = vector.load %arg1[%c0_19, %c19] : memref<4x896xbf16, #tpu.memory_space<vmem>>, vector<4x768xbf16>
    %c4 = arith.constant 4 : index
    %c0_20 = arith.constant 0 : index
    %c0_21 = arith.constant 0 : index
    %22 = vector.load %arg2[%c4, %c0_20, %c0_21] : memref<9x8x4xbf16, #tpu.memory_space<vmem>>, vector<1x8x4xbf16>
    %23 = vector.shape_cast %22 : vector<1x8x4xbf16> to vector<8x4xbf16>
    %cst_22 = arith.constant dense<0.000000e+00> : vector<8x768xf32>
    %24 = tpu.matmul %23, %21, %cst_22 {dimension_numbers = #tpu.dot_dimension_numbers<[1], [0], [0], [1], [0, 0, 1, 1], [], []>} : vector<8x4xbf16>, vector<4x768xbf16>, vector<8x768xf32> -> vector<8x768xf32>
    %25 = arith.addf %20, %24 : vector<8x768xf32>
    %c0_23 = arith.constant 0 : index
    %c20 = arith.constant 20 : index
    %26 = vector.load %arg1[%c0_23, %c20] : memref<4x896xbf16, #tpu.memory_space<vmem>>, vector<4x768xbf16>
    %c5 = arith.constant 5 : index
    %c0_24 = arith.constant 0 : index
    %c0_25 = arith.constant 0 : index
    %27 = vector.load %arg2[%c5, %c0_24, %c0_25] : memref<9x8x4xbf16, #tpu.memory_space<vmem>>, vector<1x8x4xbf16>
    %28 = vector.shape_cast %27 : vector<1x8x4xbf16> to vector<8x4xbf16>
    %cst_26 = arith.constant dense<0.000000e+00> : vector<8x768xf32>
    %29 = tpu.matmul %28, %26, %cst_26 {dimension_numbers = #tpu.dot_dimension_numbers<[1], [0], [0], [1], [0, 0, 1, 1], [], []>} : vector<8x4xbf16>, vector<4x768xbf16>, vector<8x768xf32> -> vector<8x768xf32>
    %30 = arith.addf %25, %29 : vector<8x768xf32>
    %c0_27 = arith.constant 0 : index
    %c36 = arith.constant 36 : index
    %31 = vector.load %arg1[%c0_27, %c36] : memref<4x896xbf16, #tpu.memory_space<vmem>>, vector<4x768xbf16>
    %c6 = arith.constant 6 : index
    %c0_28 = arith.constant 0 : index
    %c0_29 = arith.constant 0 : index
    %32 = vector.load %arg2[%c6, %c0_28, %c0_29] : memref<9x8x4xbf16, #tpu.memory_space<vmem>>, vector<1x8x4xbf16>
    %33 = vector.shape_cast %32 : vector<1x8x4xbf16> to vector<8x4xbf16>
    %cst_30 = arith.constant dense<0.000000e+00> : vector<8x768xf32>
    %34 = tpu.matmul %33, %31, %cst_30 {dimension_numbers = #tpu.dot_dimension_numbers<[1], [0], [0], [1], [0, 0, 1, 1], [], []>} : vector<8x4xbf16>, vector<4x768xbf16>, vector<8x768xf32> -> vector<8x768xf32>
    %35 = arith.addf %30, %34 : vector<8x768xf32>
    %c0_31 = arith.constant 0 : index
    %c37 = arith.constant 37 : index
    %36 = vector.load %arg1[%c0_31, %c37] : memref<4x896xbf16, #tpu.memory_space<vmem>>, vector<4x768xbf16>
    %c7 = arith.constant 7 : index
    %c0_32 = arith.constant 0 : index
    %c0_33 = arith.constant 0 : index
    %37 = vector.load %arg2[%c7, %c0_32, %c0_33] : memref<9x8x4xbf16, #tpu.memory_space<vmem>>, vector<1x8x4xbf16>
    %38 = vector.shape_cast %37 : vector<1x8x4xbf16> to vector<8x4xbf16>
    %cst_34 = arith.constant dense<0.000000e+00> : vector<8x768xf32>
    %39 = tpu.matmul %38, %36, %cst_34 {dimension_numbers = #tpu.dot_dimension_numbers<[1], [0], [0], [1], [0, 0, 1, 1], [], []>} : vector<8x4xbf16>, vector<4x768xbf16>, vector<8x768xf32> -> vector<8x768xf32>
    %40 = arith.addf %35, %39 : vector<8x768xf32>
    %c0_35 = arith.constant 0 : index
    %c38 = arith.constant 38 : index
    %41 = vector.load %arg1[%c0_35, %c38] : memref<4x896xbf16, #tpu.memory_space<vmem>>, vector<4x768xbf16>
    %c8 = arith.constant 8 : index
    %c0_36 = arith.constant 0 : index
    %c0_37 = arith.constant 0 : index
    %42 = vector.load %arg2[%c8, %c0_36, %c0_37] : memref<9x8x4xbf16, #tpu.memory_space<vmem>>, vector<1x8x4xbf16>
    %43 = vector.shape_cast %42 : vector<1x8x4xbf16> to vector<8x4xbf16>
    %cst_38 = arith.constant dense<0.000000e+00> : vector<8x768xf32>
    %44 = tpu.matmul %43, %41, %cst_38 {dimension_numbers = #tpu.dot_dimension_numbers<[1], [0], [0], [1], [0, 0, 1, 1], [], []>} : vector<8x4xbf16>, vector<4x768xbf16>, vector<8x768xf32> -> vector<8x768xf32>
    %45 = arith.addf %40, %44 : vector<8x768xf32>
    %c0_39 = arith.constant 0 : index
    %c0_40 = arith.constant 0 : index
    %46 = vector.load %arg3[%c0_39, %c0_40] : memref<8x1xf32, #tpu.memory_space<vmem>>, vector<8x1xf32>
    %47 = vector.broadcast %46 : vector<8x1xf32> to vector<8x768xf32>
    %48 = arith.addf %45, %47 : vector<8x768xf32>
    %cst_41 = arith.constant 0.000000e+00 : f32
    %49 = vector.broadcast %cst_41 : f32 to vector<8x768xf32>
    %50 = arith.maximumf %48, %49 : vector<8x768xf32>
    %c0_42 = arith.constant 0 : index
    %c0_43 = arith.constant 0 : index
    %51 = vector.load %arg4[%c0_42, %c0_43] : memref<8x768xf32, #tpu.memory_space<vmem>>, vector<8x768xf32>
    tpu.vector_store %arg4[%c0_42, %c0_43], %50 {strides = array<i32>} : memref<8x768xf32, #tpu.memory_space<vmem>>, vector<8x768xf32>,
    return
  }
  func.func @transform_0(%arg0: i32) -> (i32, i32) {
    %c0_i32 = arith.constant 0 : i32
    %c0_i32_0 = arith.constant 0 : i32
    %c0_i32_1 = arith.constant 0 : i32
    return %c0_i32, %c0_i32_0 : i32, i32
  }
  func.func @transform_1(%arg0: i32) -> (i32, i32, i32) {
    %c0_i32 = arith.constant 0 : i32
    %c0_i32_0 = arith.constant 0 : i32
    %c0_i32_1 = arith.constant 0 : i32
    %c0_i32_2 = arith.constant 0 : i32
    return %c0_i32, %c0_i32_0, %c0_i32_1 : i32, i32, i32
  }
  func.func @transform_2(%arg0: i32) -> (i32, i32) {
    %c0_i32 = arith.constant 0 : i32
    %c0_i32_0 = arith.constant 0 : i32
    %c0_i32_1 = arith.constant 0 : i32
    return %c0_i32, %c0_i32_0 : i32, i32
  }
  func.func @transform_3(%arg0: i32) -> (i32, i32) {
    %c0_i32 = arith.constant 0 : i32
    %c0_i32_0 = arith.constant 0 : i32
    %c0_i32_1 = arith.constant 0 : i32
    return %c0_i32, %c0_i32_0 : i32, i32
  }
}

</mosaic_0001>

<llo_original>
// kernel: _lambda_.1
$region0: #{_lambda_.1}
  #allocation0 [shape = 'u32[]', space=smem, size = 0x4, offset = 0x4, fixed_abs, tag = 'smem constant byte address 0x4 - core index']
  #allocation1 [shape = 'u32[144,128]{1,0:T(1,128)}', space=vmem, size = 0x12000, scoped, tag = 'internal scratch']
  %s0 = inlined_call_operand.vmem [shape: bf16[4,896], index: 0, kind: input, shape index: {}]
  %s1 = inlined_call_operand.vmem [shape: bf16[9,8,4], index: 1, kind: input, shape index: {}]
  %s2 = inlined_call_operand.vmem [shape: f32[8,1], index: 2, kind: input, shape index: {}]
  %s3 = inlined_call_operand.vmem [shape: f32[8,768], index: 3, kind: output, shape index: {}]
  %s4 = sld [smem:[#allocation0]]
  $region22: #{_lambda_.1} parent=0
    _
  %s6 = ssub.s32 1, %s4
  %s7 = scalar_select 0, %s6, %s4
  // Predicated region
  $region2: #{_lambda_.1} parent=0 // pred_check
    _
  $region3: #{_lambda_.1} parent=0 // pred_check_branch
    %9 = sbr.rel (0) target = $region5
  $region4: #{_lambda_.1} parent=0 // pred_region
    _
  $region5: #{_lambda_.1} parent=0 // pred_fallthru
    _
  // Predicated region
  $region6: #{_lambda_.1} parent=0 // pred_check
    _
  $region7: #{_lambda_.1} parent=0 // pred_check_branch
    %11 = sbr.rel (0) target = $region9
  $region8: #{_lambda_.1} parent=0 // pred_region
    _
  $region9: #{_lambda_.1} parent=0 // pred_fallthru
    _
  // Predicated region
  $region10: #{_lambda_.1} parent=0 // pred_check
    _
  $region11: #{_lambda_.1} parent=0 // pred_check_branch
    %13 = sbr.rel (0) target = $region13
  $region12: #{_lambda_.1} parent=0 // pred_region
    _
  $region13: #{_lambda_.1} parent=0 // pred_fallthru
    _
  %v15 = vld [vmem:[%s0] sm:$0xff]
  %v16 = vld [vmem:[%s0 + $0x8] sm:$0xf]
  %v17 = vld [vmem:[%s1] sm:$0xf]
  %v18 = vld [vmem:[%s0] sm:$0xff]
  %v19 = vld [vmem:[%s0 + $0x8] sm:$0x3f]
  %s20 = scalar_lea.vmem %s1, 4
  %v21 = vld [vmem:[%s20] sm:$0xf]
  %v24 = vcombine.high %v18, %v18
  %v26 = vunpack.c.l.s4 1983009808
  %v27 = vunpack.c.0.s8 %v26
  %v28 = vlaneseq
  %v29 = vshrl.u32 %v28, 7
  %v30 = vsub.s32 %v27, %v29
  %v31 = vrot.slane %v18, %v30
  %v33 = vunpack.c.l.s4 1983009808
  %v34 = vunpack.c.0.s8 %v33
  %v35 = vlaneseq
  %v36 = vshrl.u32 %v35, 7
  %v37 = vsub.s32 %v34, %v36
  %v38 = vrot.slane %v24, %v37
  %v39 = vcombine.high %v31, %v31
  %v40 = vcombine.high %v38, %v38
  %v41 = vcombine.high %v19, %v19
  %v43 = vunpack.c.l.s4 1983009808
  %v44 = vunpack.c.0.s8 %v43
  %v45 = vlaneseq
  %v46 = vshrl.u32 %v45, 7
  %v47 = vsub.s32 %v44, %v46
  %v48 = vrot.slane %v19, %v47
  %v50 = vunpack.c.l.s4 1983009808
  %v51 = vunpack.c.0.s8 %v50
  %v52 = vlaneseq
  %v53 = vshrl.u32 %v52, 7
  %v54 = vsub.s32 %v51, %v53
  %v55 = vrot.slane %v41, %v54
  %v56 = vcombine.high %v48, %v48
  %57 = vrot.lane.b32.xlu0 %v31, 127
  %v58 = vpop.permute.xlu0 %57
  %59 = vrot.lane.b32.xlu0 %v39, 127
  %v60 = vpop.permute.xlu0 %59
  %61 = vrot.lane.b32.xlu0 %v38, 127
  %v62 = vpop.permute.xlu0 %61
  %63 = vrot.lane.b32.xlu0 %v40, 127
  %v64 = vpop.permute.xlu0 %63
  %65 = vrot.lane.b32.xlu0 %v48, 127
  %v66 = vpop.permute.xlu0 %65
  %67 = vrot.lane.b32.xlu0 %v56, 127
  %v68 = vpop.permute.xlu0 %67
  %69 = vrot.lane.b32.xlu0 %v55, 127
  %v70 = vpop.permute.xlu0 %69
  %vm71 = vcmask 1039360
  %v72 = vsel %vm71, %v58, %v60
  %v73 = vsel %vm71, %v60, %v62
  %v74 = vsel %vm71, %v62, %v64
  %v75 = vsel %vm71, %v64, %v66
  %v76 = vsel %vm71, %v66, %v68
  %v77 = vsel %vm71, %v68, %v70
  %vm78 = vcmask 31744
  %v80 = vsel %vm78, %v21, 0
  %vm82 = vcmask 1041408
  %v84 = vsel %vm82, %v72, 0
  %v87 = vsel %vm82, %v73, 0
  %v90 = vsel %vm82, %v74, 0
  %v93 = vsel %vm82, %v75, 0
  %v96 = vsel %vm82, %v76, 0
  %v99 = vsel %vm82, %v77, 0
  %101 = vmatprep.subr.bf16.mxu0 0
  %102 = vmatpush1.bf16.msra.mxu0 0
  %103 = vmatprep.subr.bf16.mxu0 0
  %104 = vmatpush1.bf16.msra.mxu0 0
  %105 = vmatprep.subr.bf16.mxu0 0
  %106 = vmatpush1.bf16.msra.mxu0 0
  %107 = vmatprep.subr.bf16.mxu0 0
  %108 = vmatpush1.bf16.msra.mxu0 0
  %109 = vmatprep.subr.bf16.mxu0 0
  %110 = vmatpush1.bf16.msra.mxu0 0
  %111 = vmatprep.subr.bf16.mxu0 0
  %112 = vmatpush1.bf16.msra.mxu0 0
  %113 = vmatprep.subr.bf16.mxu0 0
  %114 = vmatpush1.bf16.msra.mxu0 0
  %115 = vmatprep.subr.bf16.mxu0 %v87
  %116 = vmatpush1.bf16.msra.mxu0 %v84
  %117 = vmatprep.subr.bf16.mxu0 0
  %118 = vmatpush2.bf16.msra.mxu0 0
  %119 = vmatprep.subr.bf16.mxu0 0
  %120 = vmatpush2.bf16.msra.mxu0 0
  %121 = vmatprep.subr.bf16.mxu0 0
  %122 = vmatpush2.bf16.msra.mxu0 0
  %123 = vmatprep.subr.bf16.mxu0 0
  %124 = vmatpush2.bf16.msra.mxu0 0
  %125 = vmatprep.subr.bf16.mxu0 0
  %126 = vmatpush2.bf16.msra.mxu0 0
  %127 = vmatprep.subr.bf16.mxu0 0
  %128 = vmatpush2.bf16.msra.mxu0 0
  %129 = vmatprep.subr.bf16.mxu0 0
  %130 = vmatpush2.bf16.msra.mxu0 0
  %131 = vmatprep.subr.bf16.mxu0 0
  %132 = vmatpush2.bf16.msra.mxu0 0
  %133 = vmatprep.mubr.bf16.mxu0 0
  %134 = vmatmul.mubr.bf16.gmra.mxu0 %v80
  %v135 = vpop.f32.mrf.mxu0
  %v136 = vadd.f32 0.0, %v135
  %v137 = vpop.f32.mrf.mxu0
  %v138 = vadd.f32 0.0, %v137
  %v139 = vpop.f32.mrf.mxu0
  %v140 = vpop.f32.mrf.mxu0
  %141 = vdwg.mxu0
  %142 = vmatprep.subr.bf16.mxu0 0
  %143 = vmatpush1.bf16.msra.mxu0 0
  %144 = vmatprep.subr.bf16.mxu0 0
  %145 = vmatpush1.bf16.msra.mxu0 0
  %146 = vmatprep.subr.bf16.mxu0 0
  %147 = vmatpush1.bf16.msra.mxu0 0
  %148 = vmatprep.subr.bf16.mxu0 0
  %149 = vmatpush1.bf16.msra.mxu0 0
  %150 = vmatprep.subr.bf16.mxu0 0
  %151 = vmatpush1.bf16.msra.mxu0 0
  %152 = vmatprep.subr.bf16.mxu0 0
  %153 = vmatpush1.bf16.msra.mxu0 0
  %154 = vmatprep.subr.bf16.mxu0 0
  %155 = vmatpush1.bf16.msra.mxu0 0
  %156 = vmatprep.subr.bf16.mxu0 %v93
  %157 = vmatpush1.bf16.msra.mxu0 %v90
  %158 = vmatprep.subr.bf16.mxu0 0
  %159 = vmatpush2.bf16.msra.mxu0 0
  %160 = vmatprep.subr.bf16.mxu0 0
  %161 = vmatpush2.bf16.msra.mxu0 0
  %162 = vmatprep.subr.bf16.mxu0 0
  %163 = vmatpush2.bf16.msra.mxu0 0
  %164 = vmatprep.subr.bf16.mxu0 0
  %165 = vmatpush2.bf16.msra.mxu0 0
  %166 = vmatprep.subr.bf16.mxu0 0
  %167 = vmatpush2.bf16.msra.mxu0 0
  %168 = vmatprep.subr.bf16.mxu0 0
  %169 = vmatpush2.bf16.msra.mxu0 0
  %170 = vmatprep.subr.bf16.mxu0 0
  %171 = vmatpush2.bf16.msra.mxu0 0
  %172 = vmatprep.subr.bf16.mxu0 0
  %173 = vmatpush2.bf16.msra.mxu0 0
  %174 = vmatprep.mubr.bf16.mxu0 0
  %175 = vmatmul.mubr.bf16.gmra.mxu0 %v80
  %v176 = vpop.f32.mrf.mxu0
  %v177 = vadd.f32 0.0, %v176
  %v178 = vpop.f32.mrf.mxu0
  %v179 = vadd.f32 0.0, %v178
  %v180 = vpop.f32.mrf.mxu0
  %v181 = vpop.f32.mrf.mxu0
  %182 = vdwg.mxu0
  %183 = vmatprep.subr.bf16.mxu0 0
  %184 = vmatpush1.bf16.msra.mxu0 0
  %185 = vmatprep.subr.bf16.mxu0 0
  %186 = vmatpush1.bf16.msra.mxu0 0
  %187 = vmatprep.subr.bf16.mxu0 0
  %188 = vmatpush1.bf16.msra.mxu0 0
  %189 = vmatprep.subr.bf16.mxu0 0
  %190 = vmatpush1.bf16.msra.mxu0 0
  %191 = vmatprep.subr.bf16.mxu0 0
  %192 = vmatpush1.bf16.msra.mxu0 0
  %193 = vmatprep.subr.bf16.mxu0 0
  %194 = vmatpush1.bf16.msra.mxu0 0
  %195 = vmatprep.subr.bf16.mxu0 0
  %196 = vmatpush1.bf16.msra.mxu0 0
  %197 = vmatprep.subr.bf16.mxu0 %v99
  %198 = vmatpush1.bf16.msra.mxu0 %v96
  %199 = vmatprep.subr.bf16.mxu0 0
  %200 = vmatpush2.bf16.msra.mxu0 0
  %201 = vmatprep.subr.bf16.mxu0 0
  %202 = vmatpush2.bf16.msra.mxu0 0
  %203 = vmatprep.subr.bf16.mxu0 0
  %204 = vmatpush2.bf16.msra.mxu0 0
  %205 = vmatprep.subr.bf16.mxu0 0
  %206 = vmatpush2.bf16.msra.mxu0 0
  %207 = vmatprep.subr.bf16.mxu0 0
  %208 = vmatpush2.bf16.msra.mxu0 0
  %209 = vmatprep.subr.bf16.mxu0 0
  %210 = vmatpush2.bf16.msra.mxu0 0
  %211 = vmatprep.subr.bf16.mxu0 0
  %212 = vmatpush2.bf16.msra.mxu0 0
  %213 = vmatprep.subr.bf16.mxu0 0
  %214 = vmatpush2.bf16.msra.mxu0 0
  %215 = vmatprep.mubr.bf16.mxu0 0
  %216 = vmatmul.mubr.bf16.gmra.mxu0 %v80
  %v217 = vpop.f32.mrf.mxu0
  %v218 = vadd.f32 0.0, %v217
  %v219 = vpop.f32.mrf.mxu0
  %v220 = vadd.f32 0.0, %v219
  %v221 = vpop.f32.mrf.mxu0
  %v222 = vpop.f32.mrf.mxu0
  %223 = vdwg.mxu0
  %v226 = vcombine.high %v15, %v15
  %v228 = vunpack.c.l.s4 1983009808
  %v229 = vunpack.c.0.s8 %v228
  %v230 = vlaneseq
  %v231 = vshrl.u32 %v230, 7
  %v232 = vsub.s32 %v229, %v231
  %v233 = vrot.slane %v15, %v232
  %v235 = vunpack.c.l.s4 1983009808
  %v236 = vunpack.c.0.s8 %v235
  %v237 = vlaneseq
  %v238 = vshrl.u32 %v237, 7
  %v239 = vsub.s32 %v236, %v238
  %v240 = vrot.slane %v226, %v239
  %v241 = vcombine.high %v233, %v233
  %v242 = vcombine.high %v240, %v240
  %v244 = vunpack.c.l.s4 1983009808
  %v245 = vunpack.c.0.s8 %v244
  %v246 = vlaneseq
  %v247 = vshrl.u32 %v246, 7
  %v248 = vsub.s32 %v245, %v247
  %v249 = vrot.slane %v16, %v248
  %v250 = vcombine.high %v249, %v249
  %v252 = vsel %vm78, %v17, 0
  %v255 = vsel %vm82, %v233, 0
  %v258 = vsel %vm82, %v241, 0
  %v261 = vsel %vm82, %v240, 0
  %v264 = vsel %vm82, %v242, 0
  %v267 = vsel %vm82, %v249, 0
  %v270 = vsel %vm82, %v250, 0
  %272 = vmatprep.subr.bf16.mxu0 0
  %273 = vmatpush1.bf16.msra.mxu0 0
  %274 = vmatprep.subr.bf16.mxu0 0
  %275 = vmatpush1.bf16.msra.mxu0 0
  %276 = vmatprep.subr.bf16.mxu0 0
  %277 = vmatpush1.bf16.msra.mxu0 0
  %278 = vmatprep.subr.bf16.mxu0 0
  %279 = vmatpush1.bf16.msra.mxu0 0
  %280 = vmatprep.subr.bf16.mxu0 0
  %281 = vmatpush1.bf16.msra.mxu0 0
  %282 = vmatprep.subr.bf16.mxu0 0
  %283 = vmatpush1.bf16.msra.mxu0 0
  %284 = vmatprep.subr.bf16.mxu0 0
  %285 = vmatpush1.bf16.msra.mxu0 0
  %286 = vmatprep.subr.bf16.mxu0 %v258
  %287 = vmatpush1.bf16.msra.mxu0 %v255
  %288 = vmatprep.subr.bf16.mxu0 0
  %289 = vmatpush2.bf16.msra.mxu0 0
  %290 = vmatprep.subr.bf16.mxu0 0
  %291 = vmatpush2.bf16.msra.mxu0 0
  %292 = vmatprep.subr.bf16.mxu0 0
  %293 = vmatpush2.bf16.msra.mxu0 0
  %294 = vmatprep.subr.bf16.mxu0 0
  %295 = vmatpush2.bf16.msra.mxu0 0
  %296 = vmatprep.subr.bf16.mxu0 0
  %297 = vmatpush2.bf16.msra.mxu0 0
  %298 = vmatprep.subr.bf16.mxu0 0
  %299 = vmatpush2.bf16.msra.mxu0 0
  %300 = vmatprep.subr.bf16.mxu0 0
  %301 = vmatpush2.bf16.msra.mxu0 0
  %302 = vmatprep.subr.bf16.mxu0 0
  %303 = vmatpush2.bf16.msra.mxu0 0
  %304 = vmatprep.mubr.bf16.mxu0 0
  %305 = vmatmul.mubr.bf16.gmra.mxu0 %v252
  %v306 = vpop.f32.mrf.mxu0
  %v307 = vadd.f32 %v136, %v306
  %v308 = vpop.f32.mrf.mxu0
  %v309 = vadd.f32 %v138, %v308
  %v310 = vpop.f32.mrf.mxu0
  %v311 = vpop.f32.mrf.mxu0
  %312 = vdwg.mxu0
  %313 = vmatprep.subr.bf16.mxu0 0
  %314 = vmatpush1.bf16.msra.mxu0 0
  %315 = vmatprep.subr.bf16.mxu0 0
  %316 = vmatpush1.bf16.msra.mxu0 0
  %317 = vmatprep.subr.bf16.mxu0 0
  %318 = vmatpush1.bf16.msra.mxu0 0
  %319 = vmatprep.subr.bf16.mxu0 0
  %320 = vmatpush1.bf16.msra.mxu0 0
  %321 = vmatprep.subr.bf16.mxu0 0
  %322 = vmatpush1.bf16.msra.mxu0 0
  %323 = vmatprep.subr.bf16.mxu0 0
  %324 = vmatpush1.bf16.msra.mxu0 0
  %325 = vmatprep.subr.bf16.mxu0 0
  %326 = vmatpush1.bf16.msra.mxu0 0
  %327 = vmatprep.subr.bf16.mxu0 %v264
  %328 = vmatpush1.bf16.msra.mxu0 %v261
  %329 = vmatprep.subr.bf16.mxu0 0
  %330 = vmatpush2.bf16.msra.mxu0 0
  %331 = vmatprep.subr.bf16.mxu0 0
  %332 = vmatpush2.bf16.msra.mxu0 0
  %333 = vmatprep.subr.bf16.mxu0 0
  %334 = vmatpush2.bf16.msra.mxu0 0
  %335 = vmatprep.subr.bf16.mxu0 0
  %336 = vmatpush2.bf16.msra.mxu0 0
  %337 = vmatprep.subr.bf16.mxu0 0
  %338 = vmatpush2.bf16.msra.mxu0 0
  %339 = vmatprep.subr.bf16.mxu0 0
  %340 = vmatpush2.bf16.msra.mxu0 0
  %341 = vmatprep.subr.bf16.mxu0 0
  %342 = vmatpush2.bf16.msra.mxu0 0
  %343 = vmatprep.subr.bf16.mxu0 0
  %344 = vmatpush2.bf16.msra.mxu0 0
  %345 = vmatprep.mubr.bf16.mxu0 0
  %346 = vmatmul.mubr.bf16.gmra.mxu0 %v252
  %v347 = vpop.f32.mrf.mxu0
  %v348 = vadd.f32 %v177, %v347
  %v349 = vpop.f32.mrf.mxu0
  %v350 = vadd.f32 %v179, %v349
  %v351 = vpop.f32.mrf.mxu0
  %v352 = vpop.f32.mrf.mxu0
  %353 = vdwg.mxu0
  %354 = vmatprep.subr.bf16.mxu0 0
  %355 = vmatpush1.bf16.msra.mxu0 0
  %356 = vmatprep.subr.bf16.mxu0 0
  %357 = vmatpush1.bf16.msra.mxu0 0
  %358 = vmatprep.subr.bf16.mxu0 0
  %359 = vmatpush1.bf16.msra.mxu0 0
  %360 = vmatprep.subr.bf16.mxu0 0
  %361 = vmatpush1.bf16.msra.mxu0 0
  %362 = vmatprep.subr.bf16.mxu0 0
  %363 = vmatpush1.bf16.msra.mxu0 0
  %364 = vmatprep.subr.bf16.mxu0 0
  %365 = vmatpush1.bf16.msra.mxu0 0
  %366 = vmatprep.subr.bf16.mxu0 0
  %367 = vmatpush1.bf16.msra.mxu0 0
  %368 = vmatprep.subr.bf16.mxu0 %v270
  %369 = vmatpush1.bf16.msra.mxu0 %v267
  %370 = vmatprep.subr.bf16.mxu0 0
  %371 = vmatpush2.bf16.msra.mxu0 0
  %372 = vmatprep.subr.bf16.mxu0 0
  %373 = vmatpush2.bf16.msra.mxu0 0
  %374 = vmatprep.subr.bf16.mxu0 0
  %375 = vmatpush2.bf16.msra.mxu0 0
  %376 = vmatprep.subr.bf16.mxu0 0
  %377 = vmatpush2.bf16.msra.mxu0 0
  %378 = vmatprep.subr.bf16.mxu0 0
  %379 = vmatpush2.bf16.msra.mxu0 0
  %380 = vmatprep.subr.bf16.mxu0 0
  %381 = vmatpush2.bf16.msra.mxu0 0
  %382 = vmatprep.subr.bf16.mxu0 0
  %383 = vmatpush2.bf16.msra.mxu0 0
  %384 = vmatprep.subr.bf16.mxu0 0
  %385 = vmatpush2.bf16.msra.mxu0 0
  %386 = vmatprep.mubr.bf16.mxu0 0
  %387 = vmatmul.mubr.bf16.gmra.mxu0 %v252
  %v388 = vpop.f32.mrf.mxu0
  %v389 = vadd.f32 %v218, %v388
  %v390 = vpop.f32.mrf.mxu0
  %v391 = vadd.f32 %v220, %v390
  %v392 = vpop.f32.mrf.mxu0
  %v393 = vpop.f32.mrf.mxu0
  %394 = vdwg.mxu0
  %v395 = vld [vmem:[%s0] sm:$0xff]
  %v396 = vld [vmem:[%s0 + $0x8] sm:$0x3f]
  %s397 = scalar_lea.vmem %s1, 8
  %v398 = vld [vmem:[%s397] sm:$0xf]
  %v401 = vcombine.high %v395, %v395
  %v403 = vunpack.c.l.s4 1983009808
  %v404 = vunpack.c.0.s8 %v403
  %v405 = vlaneseq
  %v406 = vshrl.u32 %v405, 7
  %v407 = vsub.s32 %v404, %v406
  %v408 = vrot.slane %v395, %v407
  %v410 = vunpack.c.l.s4 1983009808
  %v411 = vunpack.c.0.s8 %v410
  %v412 = vlaneseq
  %v413 = vshrl.u32 %v412, 7
  %v414 = vsub.s32 %v411, %v413
  %v415 = vrot.slane %v401, %v414
  %v416 = vcombine.high %v408, %v408
  %v417 = vcombine.high %v415, %v415
  %v418 = vcombine.high %v396, %v396
  %v420 = vunpack.c.l.s4 1983009808
  %v421 = vunpack.c.0.s8 %v420
  %v422 = vlaneseq
  %v423 = vshrl.u32 %v422, 7
  %v424 = vsub.s32 %v421, %v423
  %v425 = vrot.slane %v396, %v424
  %v427 = vunpack.c.l.s4 1983009808
  %v428 = vunpack.c.0.s8 %v427
  %v429 = vlaneseq
  %v430 = vshrl.u32 %v429, 7
  %v431 = vsub.s32 %v428, %v430
  %v432 = vrot.slane %v418, %v431
  %v433 = vcombine.high %v425, %v425
  %434 = vrot.lane.b32.xlu0 %v408, 126
  %v435 = vpop.permute.xlu0 %434
  %436 = vrot.lane.b32.xlu0 %v416, 126
  %v437 = vpop.permute.xlu0 %436
  %438 = vrot.lane.b32.xlu0 %v415, 126
  %v439 = vpop.permute.xlu0 %438
  %440 = vrot.lane.b32.xlu0 %v417, 126
  %v441 = vpop.permute.xlu0 %440
  %442 = vrot.lane.b32.xlu0 %v425, 126
  %v443 = vpop.permute.xlu0 %442
  %444 = vrot.lane.b32.xlu0 %v433, 126
  %v445 = vpop.permute.xlu0 %444
  %446 = vrot.lane.b32.xlu0 %v432, 126
  %v447 = vpop.permute.xlu0 %446
  %vm448 = vcmask 1031168
  %v449 = vsel %vm448, %v435, %v437
  %v450 = vsel %vm448, %v437, %v439
  %v451 = vsel %vm448, %v439, %v441
  %v452 = vsel %vm448, %v441, %v443
  %v453 = vsel %vm448, %v443, %v445
  %v454 = vsel %vm448, %v445, %v447
  %v456 = vsel %vm78, %v398, 0
  %v459 = vsel %vm82, %v449, 0
  %v462 = vsel %vm82, %v450, 0
  %v465 = vsel %vm82, %v451, 0
  %v468 = vsel %vm82, %v452, 0
  %v471 = vsel %vm82, %v453, 0
  %v474 = vsel %vm82, %v454, 0
  %476 = vmatprep.subr.bf16.mxu0 0
  %477 = vmatpush1.bf16.msra.mxu0 0
  %478 = vmatprep.subr.bf16.mxu0 0
  %479 = vmatpush1.bf16.msra.mxu0 0
  %480 = vmatprep.subr.bf16.mxu0 0
  %481 = vmatpush1.bf16.msra.mxu0 0
  %482 = vmatprep.subr.bf16.mxu0 0
  %483 = vmatpush1.bf16.msra.mxu0 0
  %484 = vmatprep.subr.bf16.mxu0 0
  %485 = vmatpush1.bf16.msra.mxu0 0
  %486 = vmatprep.subr.bf16.mxu0 0
  %487 = vmatpush1.bf16.msra.mxu0 0
  %488 = vmatprep.subr.bf16.mxu0 0
  %489 = vmatpush1.bf16.msra.mxu0 0
  %490 = vmatprep.subr.bf16.mxu0 %v462
  %491 = vmatpush1.bf16.msra.mxu0 %v459
  %492 = vmatprep.subr.bf16.mxu0 0
  %493 = vmatpush2.bf16.msra.mxu0 0
  %494 = vmatprep.subr.bf16.mxu0 0
  %495 = vmatpush2.bf16.msra.mxu0 0
  %496 = vmatprep.subr.bf16.mxu0 0
  %497 = vmatpush2.bf16.msra.mxu0 0
  %498 = vmatprep.subr.bf16.mxu0 0
  %499 = vmatpush2.bf16.msra.mxu0 0
  %500 = vmatprep.subr.bf16.mxu0 0
  %501 = vmatpush2.bf16.msra.mxu0 0
  %502 = vmatprep.subr.bf16.mxu0 0
  %503 = vmatpush2.bf16.msra.mxu0 0
  %504 = vmatprep.subr.bf16.mxu0 0
  %505 = vmatpush2.bf16.msra.mxu0 0
  %506 = vmatprep.subr.bf16.mxu0 0
  %507 = vmatpush2.bf16.msra.mxu0 0
  %508 = vmatprep.mubr.bf16.mxu0 0
  %509 = vmatmul.mubr.bf16.gmra.mxu0 %v456
  %v510 = vpop.f32.mrf.mxu0
  %v511 = vadd.f32 0.0, %v510
  %v512 = vpop.f32.mrf.mxu0
  %v513 = vadd.f32 0.0, %v512
  %v514 = vpop.f32.mrf.mxu0
  %v515 = vpop.f32.mrf.mxu0
  %516 = vdwg.mxu0
  %517 = vmatprep.subr.bf16.mxu0 0
  %518 = vmatpush1.bf16.msra.mxu0 0
  %519 = vmatprep.subr.bf16.mxu0 0
  %520 = vmatpush1.bf16.msra.mxu0 0
  %521 = vmatprep.subr.bf16.mxu0 0
  %522 = vmatpush1.bf16.msra.mxu0 0
  %523 = vmatprep.subr.bf16.mxu0 0
  %524 = vmatpush1.bf16.msra.mxu0 0
  %525 = vmatprep.subr.bf16.mxu0 0
  %526 = vmatpush1.bf16.msra.mxu0 0
  %527 = vmatprep.subr.bf16.mxu0 0
  %528 = vmatpush1.bf16.msra.mxu0 0
  %529 = vmatprep.subr.bf16.mxu0 0
  %530 = vmatpush1.bf16.msra.mxu0 0
  %531 = vmatprep.subr.bf16.mxu0 %v468
  %532 = vmatpush1.bf16.msra.mxu0 %v465
  %533 = vmatprep.subr.bf16.mxu0 0
  %534 = vmatpush2.bf16.msra.mxu0 0
  %535 = vmatprep.subr.bf16.mxu0 0
  %536 = vmatpush2.bf16.msra.mxu0 0
  %537 = vmatprep.subr.bf16.mxu0 0
  %538 = vmatpush2.bf16.msra.mxu0 0
  %539 = vmatprep.subr.bf16.mxu0 0
  %540 = vmatpush2.bf16.msra.mxu0 0
  %541 = vmatprep.subr.bf16.mxu0 0
  %542 = vmatpush2.bf16.msra.mxu0 0
  %543 = vmatprep.subr.bf16.mxu0 0
  %544 = vmatpush2.bf16.msra.mxu0 0
  %545 = vmatprep.subr.bf16.mxu0 0
  %546 = vmatpush2.bf16.msra.mxu0 0
  %547 = vmatprep.subr.bf16.mxu0 0
  %548 = vmatpush2.bf16.msra.mxu0 0
  %549 = vmatprep.mubr.bf16.mxu0 0
  %550 = vmatmul.mubr.bf16.gmra.mxu0 %v456
  %v551 = vpop.f32.mrf.mxu0
  %v552 = vadd.f32 0.0, %v551
  %v553 = vpop.f32.mrf.mxu0
  %v554 = vadd.f32 0.0, %v553
  %v555 = vpop.f32.mrf.mxu0
  %v556 = vpop.f32.mrf.mxu0
  %557 = vdwg.mxu0
  %558 = vmatprep.subr.bf16.mxu0 0
  %559 = vmatpush1.bf16.msra.mxu0 0
  %560 = vmatprep.subr.bf16.mxu0 0
  %561 = vmatpush1.bf16.msra.mxu0 0
  %562 = vmatprep.subr.bf16.mxu0 0
  %563 = vmatpush1.bf16.msra.mxu0 0
  %564 = vmatprep.subr.bf16.mxu0 0
  %565 = vmatpush1.bf16.msra.mxu0 0
  %566 = vmatprep.subr.bf16.mxu0 0
  %567 = vmatpush1.bf16.msra.mxu0 0
  %568 = vmatprep.subr.bf16.mxu0 0
  %569 = vmatpush1.bf16.msra.mxu0 0
  %570 = vmatprep.subr.bf16.mxu0 0
  %571 = vmatpush1.bf16.msra.mxu0 0
  %572 = vmatprep.subr.bf16.mxu0 %v474
  %573 = vmatpush1.bf16.msra.mxu0 %v471
  %574 = vmatprep.subr.bf16.mxu0 0
  %575 = vmatpush2.bf16.msra.mxu0 0
  %576 = vmatprep.subr.bf16.mxu0 0
  %577 = vmatpush2.bf16.msra.mxu0 0
  %578 = vmatprep.subr.bf16.mxu0 0
  %579 = vmatpush2.bf16.msra.mxu0 0
  %580 = vmatprep.subr.bf16.mxu0 0
  %581 = vmatpush2.bf16.msra.mxu0 0
  %582 = vmatprep.subr.bf16.mxu0 0
  %583 = vmatpush2.bf16.msra.mxu0 0
  %584 = vmatprep.subr.bf16.mxu0 0
  %585 = vmatpush2.bf16.msra.mxu0 0
  %586 = vmatprep.subr.bf16.mxu0 0
  %587 = vmatpush2.bf16.msra.mxu0 0
  %588 = vmatprep.subr.bf16.mxu0 0
  %589 = vmatpush2.bf16.msra.mxu0 0
  %590 = vmatprep.mubr.bf16.mxu0 0
  %591 = vmatmul.mubr.bf16.gmra.mxu0 %v456
  %v592 = vpop.f32.mrf.mxu0
  %v593 = vadd.f32 0.0, %v592
  %v594 = vpop.f32.mrf.mxu0
  %v595 = vadd.f32 0.0, %v594
  %v596 = vpop.f32.mrf.mxu0
  %v597 = vpop.f32.mrf.mxu0
  %598 = vdwg.mxu0
  %v599 = vadd.f32 %v307, %v511
  %v600 = vadd.f32 %v309, %v513
  %v601 = vadd.f32 %v348, %v552
  %v602 = vadd.f32 %v350, %v554
  %v603 = vadd.f32 %v389, %v593
  %v604 = vadd.f32 %v391, %v595
  %v605 = vld [vmem:[%s0] sm:$0xff]
  %v606 = vld [vmem:[%s0 + $0x8] sm:$0x3f]
  %s607 = scalar_lea.vmem %s1, 12
  %v608 = vld [vmem:[%s607] sm:$0xf]
  %v611 = vcombine.high %v605, %v605
  %v613 = vunpack.c.l.s4 1983009808
  %v614 = vunpack.c.0.s8 %v613
  %v615 = vlaneseq
  %v616 = vshrl.u32 %v615, 7
  %v617 = vsub.s32 %v614, %v616
  %v618 = vrot.slane %v605, %v617
  %v620 = vunpack.c.l.s4 1983009808
  %v621 = vunpack.c.0.s8 %v620
  %v622 = vlaneseq
  %v623 = vshrl.u32 %v622, 7
  %v624 = vsub.s32 %v621, %v623
  %v625 = vrot.slane %v611, %v624
  %v626 = vcombine.high %v618, %v618
  %v627 = vcombine.high %v625, %v625
  %v628 = vcombine.high %v606, %v606
  %v630 = vunpack.c.l.s4 1983009808
  %v631 = vunpack.c.0.s8 %v630
  %v632 = vlaneseq
  %v633 = vshrl.u32 %v632, 7
  %v634 = vsub.s32 %v631, %v633
  %v635 = vrot.slane %v606, %v634
  %v637 = vunpack.c.l.s4 1983009808
  %v638 = vunpack.c.0.s8 %v637
  %v639 = vlaneseq
  %v640 = vshrl.u32 %v639, 7
  %v641 = vsub.s32 %v638, %v640
  %v642 = vrot.slane %v628, %v641
  %v643 = vcombine.high %v635, %v635
  %644 = vrot.lane.b32.xlu0 %v618, 110
  %v645 = vpop.permute.xlu0 %644
  %646 = vrot.lane.b32.xlu0 %v626, 110
  %v647 = vpop.permute.xlu0 %646
  %648 = vrot.lane.b32.xlu0 %v625, 110
  %v649 = vpop.permute.xlu0 %648
  %650 = vrot.lane.b32.xlu0 %v627, 110
  %v651 = vpop.permute.xlu0 %650
  %652 = vrot.lane.b32.xlu0 %v635, 110
  %v653 = vpop.permute.xlu0 %652
  %654 = vrot.lane.b32.xlu0 %v643, 110
  %v655 = vpop.permute.xlu0 %654
  %656 = vrot.lane.b32.xlu0 %v642, 110
  %v657 = vpop.permute.xlu0 %656
  %vm658 = vcmask 900096
  %v659 = vsel %vm658, %v645, %v647
  %v660 = vsel %vm658, %v647, %v649
  %v661 = vsel %vm658, %v649, %v651
  %v662 = vsel %vm658, %v651, %v653
  %v663 = vsel %vm658, %v653, %v655
  %v664 = vsel %vm658, %v655, %v657
  %v666 = vsel %vm78, %v608, 0
  %v669 = vsel %vm82, %v659, 0
  %v672 = vsel %vm82, %v660, 0
  %v675 = vsel %vm82, %v661, 0
  %v678 = vsel %vm82, %v662, 0
  %v681 = vsel %vm82, %v663, 0
  %v684 = vsel %vm82, %v664, 0
  %686 = vmatprep.subr.bf16.mxu0 0
  %687 = vmatpush1.bf16.msra.mxu0 0
  %688 = vmatprep.subr.bf16.mxu0 0
  %689 = vmatpush1.bf16.msra.mxu0 0
  %690 = vmatprep.subr.bf16.mxu0 0
  %691 = vmatpush1.bf16.msra.mxu0 0
  %692 = vmatprep.subr.bf16.mxu0 0
  %693 = vmatpush1.bf16.msra.mxu0 0
  %694 = vmatprep.subr.bf16.mxu0 0
  %695 = vmatpush1.bf16.msra.mxu0 0
  %696 = vmatprep.subr.bf16.mxu0 0
  %697 = vmatpush1.bf16.msra.mxu0 0
  %698 = vmatprep.subr.bf16.mxu0 0
  %699 = vmatpush1.bf16.msra.mxu0 0
  %700 = vmatprep.subr.bf16.mxu0 %v672
  %701 = vmatpush1.bf16.msra.mxu0 %v669
  %702 = vmatprep.subr.bf16.mxu0 0
  %703 = vmatpush2.bf16.msra.mxu0 0
  %704 = vmatprep.subr.bf16.mxu0 0
  %705 = vmatpush2.bf16.msra.mxu0 0
  %706 = vmatprep.subr.bf16.mxu0 0
  %707 = vmatpush2.bf16.msra.mxu0 0
  %708 = vmatprep.subr.bf16.mxu0 0
  %709 = vmatpush2.bf16.msra.mxu0 0
  %710 = vmatprep.subr.bf16.mxu0 0
  %711 = vmatpush2.bf16.msra.mxu0 0
  %712 = vmatprep.subr.bf16.mxu0 0
  %713 = vmatpush2.bf16.msra.mxu0 0
  %714 = vmatprep.subr.bf16.mxu0 0
  %715 = vmatpush2.bf16.msra.mxu0 0
  %716 = vmatprep.subr.bf16.mxu0 0
  %717 = vmatpush2.bf16.msra.mxu0 0
  %718 = vmatprep.mubr.bf16.mxu0 0
  %719 = vmatmul.mubr.bf16.gmra.mxu0 %v666
  %v720 = vpop.f32.mrf.mxu0
  %v721 = vadd.f32 0.0, %v720
  %v722 = vpop.f32.mrf.mxu0
  %v723 = vadd.f32 0.0, %v722
  %v724 = vpop.f32.mrf.mxu0
  %v725 = vpop.f32.mrf.mxu0
  %726 = vdwg.mxu0
  %727 = vmatprep.subr.bf16.mxu0 0
  %728 = vmatpush1.bf16.msra.mxu0 0
  %729 = vmatprep.subr.bf16.mxu0 0
  %730 = vmatpush1.bf16.msra.mxu0 0
  %731 = vmatprep.subr.bf16.mxu0 0
  %732 = vmatpush1.bf16.msra.mxu0 0
  %733 = vmatprep.subr.bf16.mxu0 0
  %734 = vmatpush1.bf16.msra.mxu0 0
  %735 = vmatprep.subr.bf16.mxu0 0
  %736 = vmatpush1.bf16.msra.mxu0 0
  %737 = vmatprep.subr.bf16.mxu0 0
  %738 = vmatpush1.bf16.msra.mxu0 0
  %739 = vmatprep.subr.bf16.mxu0 0
  %740 = vmatpush1.bf16.msra.mxu0 0
  %741 = vmatprep.subr.bf16.mxu0 %v678
  %742 = vmatpush1.bf16.msra.mxu0 %v675
  %743 = vmatprep.subr.bf16.mxu0 0
  %744 = vmatpush2.bf16.msra.mxu0 0
  %745 = vmatprep.subr.bf16.mxu0 0
  %746 = vmatpush2.bf16.msra.mxu0 0
  %747 = vmatprep.subr.bf16.mxu0 0
  %748 = vmatpush2.bf16.msra.mxu0 0
  %749 = vmatprep.subr.bf16.mxu0 0
  %750 = vmatpush2.bf16.msra.mxu0 0
  %751 = vmatprep.subr.bf16.mxu0 0
  %752 = vmatpush2.bf16.msra.mxu0 0
  %753 = vmatprep.subr.bf16.mxu0 0
  %754 = vmatpush2.bf16.msra.mxu0 0
  %755 = vmatprep.subr.bf16.mxu0 0
  %756 = vmatpush2.bf16.msra.mxu0 0
  %757 = vmatprep.subr.bf16.mxu0 0
  %758 = vmatpush2.bf16.msra.mxu0 0
  %759 = vmatprep.mubr.bf16.mxu0 0
  %760 = vmatmul.mubr.bf16.gmra.mxu0 %v666
  %v761 = vpop.f32.mrf.mxu0
  %v762 = vadd.f32 0.0, %v761
  %v763 = vpop.f32.mrf.mxu0
  %v764 = vadd.f32 0.0, %v763
  %v765 = vpop.f32.mrf.mxu0
  %v766 = vpop.f32.mrf.mxu0
  %767 = vdwg.mxu0
  %768 = vmatprep.subr.bf16.mxu0 0
  %769 = vmatpush1.bf16.msra.mxu0 0
  %770 = vmatprep.subr.bf16.mxu0 0
  %771 = vmatpush1.bf16.msra.mxu0 0
  %772 = vmatprep.subr.bf16.mxu0 0
  %773 = vmatpush1.bf16.msra.mxu0 0
  %774 = vmatprep.subr.bf16.mxu0 0
  %775 = vmatpush1.bf16.msra.mxu0 0
  %776 = vmatprep.subr.bf16.mxu0 0
  %777 = vmatpush1.bf16.msra.mxu0 0
  %778 = vmatprep.subr.bf16.mxu0 0
  %779 = vmatpush1.bf16.msra.mxu0 0
  %780 = vmatprep.subr.bf16.mxu0 0
  %781 = vmatpush1.bf16.msra.mxu0 0
  %782 = vmatprep.subr.bf16.mxu0 %v684
  %783 = vmatpush1.bf16.msra.mxu0 %v681
  %784 = vmatprep.subr.bf16.mxu0 0
  %785 = vmatpush2.bf16.msra.mxu0 0
  %786 = vmatprep.subr.bf16.mxu0 0
  %787 = vmatpush2.bf16.msra.mxu0 0
  %788 = vmatprep.subr.bf16.mxu0 0
  %789 = vmatpush2.bf16.msra.mxu0 0
  %790 = vmatprep.subr.bf16.mxu0 0
  %791 = vmatpush2.bf16.msra.mxu0 0
  %792 = vmatprep.subr.bf16.mxu0 0
  %793 = vmatpush2.bf16.msra.mxu0 0
  %794 = vmatprep.subr.bf16.mxu0 0
  %795 = vmatpush2.bf16.msra.mxu0 0
  %796 = vmatprep.subr.bf16.mxu0 0
  %797 = vmatpush2.bf16.msra.mxu0 0
  %798 = vmatprep.subr.bf16.mxu0 0
  %799 = vmatpush2.bf16.msra.mxu0 0
  %800 = vmatprep.mubr.bf16.mxu0 0
  %801 = vmatmul.mubr.bf16.gmra.mxu0 %v666
  %v802 = vpop.f32.mrf.mxu0
  %v803 = vadd.f32 0.0, %v802
  %v804 = vpop.f32.mrf.mxu0
  %v805 = vadd.f32 0.0, %v804
  %v806 = vpop.f32.mrf.mxu0
  %v807 = vpop.f32.mrf.mxu0
  %808 = vdwg.mxu0
  %v809 = vadd.f32 %v599, %v721
  %v810 = vadd.f32 %v600, %v723
  %v811 = vadd.f32 %v601, %v762
  %v812 = vadd.f32 %v602, %v764
  %v813 = vadd.f32 %v603, %v803
  %v814 = vadd.f32 %v604, %v805
  %v815 = vld [vmem:[%s0] sm:$0xff]
  %v816 = vld [vmem:[%s0 + $0x8] sm:$0x3f]
  %s817 = scalar_lea.vmem %s1, 16
  %v818 = vld [vmem:[%s817] sm:$0xf]
  %v821 = vcombine.high %v815, %v815
  %v823 = vunpack.c.l.s4 1983009808
  %v824 = vunpack.c.0.s8 %v823
  %v825 = vlaneseq
  %v826 = vshrl.u32 %v825, 7
  %v827 = vsub.s32 %v824, %v826
  %v828 = vrot.slane %v815, %v827
  %v830 = vunpack.c.l.s4 1983009808
  %v831 = vunpack.c.0.s8 %v830
  %v832 = vlaneseq
  %v833 = vshrl.u32 %v832, 7
  %v834 = vsub.s32 %v831, %v833
  %v835 = vrot.slane %v821, %v834
  %v836 = vcombine.high %v828, %v828
  %v837 = vcombine.high %v835, %v835
  %v838 = vcombine.high %v816, %v816
  %v840 = vunpack.c.l.s4 1983009808
  %v841 = vunpack.c.0.s8 %v840
  %v842 = vlaneseq
  %v843 = vshrl.u32 %v842, 7
  %v844 = vsub.s32 %v841, %v843
  %v845 = vrot.slane %v816, %v844
  %v847 = vunpack.c.l.s4 1983009808
  %v848 = vunpack.c.0.s8 %v847
  %v849 = vlaneseq
  %v850 = vshrl.u32 %v849, 7
  %v851 = vsub.s32 %v848, %v850
  %v852 = vrot.slane %v838, %v851
  %v853 = vcombine.high %v845, %v845
  %854 = vrot.lane.b32.xlu0 %v828, 109
  %v855 = vpop.permute.xlu0 %854
  %856 = vrot.lane.b32.xlu0 %v836, 109
  %v857 = vpop.permute.xlu0 %856
  %858 = vrot.lane.b32.xlu0 %v835, 109
  %v859 = vpop.permute.xlu0 %858
  %860 = vrot.lane.b32.xlu0 %v837, 109
  %v861 = vpop.permute.xlu0 %860
  %862 = vrot.lane.b32.xlu0 %v845, 109
  %v863 = vpop.permute.xlu0 %862
  %864 = vrot.lane.b32.xlu0 %v853, 109
  %v865 = vpop.permute.xlu0 %864
  %866 = vrot.lane.b32.xlu0 %v852, 109
  %v867 = vpop.permute.xlu0 %866
  %vm868 = vcmask 891904
  %v869 = vsel %vm868, %v855, %v857
  %v870 = vsel %vm868, %v857, %v859
  %v871 = vsel %vm868, %v859, %v861
  %v872 = vsel %vm868, %v861, %v863
  %v873 = vsel %vm868, %v863, %v865
  %v874 = vsel %vm868, %v865, %v867
  %v876 = vsel %vm78, %v818, 0
  %v879 = vsel %vm82, %v869, 0
  %v882 = vsel %vm82, %v870, 0
  %v885 = vsel %vm82, %v871, 0
  %v888 = vsel %vm82, %v872, 0
  %v891 = vsel %vm82, %v873, 0
  %v894 = vsel %vm82, %v874, 0
  %896 = vmatprep.subr.bf16.mxu0 0
  %897 = vmatpush1.bf16.msra.mxu0 0
  %898 = vmatprep.subr.bf16.mxu0 0
  %899 = vmatpush1.bf16.msra.mxu0 0
  %900 = vmatprep.subr.bf16.mxu0 0
  %901 = vmatpush1.bf16.msra.mxu0 0
  %902 = vmatprep.subr.bf16.mxu0 0
  %903 = vmatpush1.bf16.msra.mxu0 0
  %904 = vmatprep.subr.bf16.mxu0 0
  %905 = vmatpush1.bf16.msra.mxu0 0
  %906 = vmatprep.subr.bf16.mxu0 0
  %907 = vmatpush1.bf16.msra.mxu0 0
  %908 = vmatprep.subr.bf16.mxu0 0
  %909 = vmatpush1.bf16.msra.mxu0 0
  %910 = vmatprep.subr.bf16.mxu0 %v882
  %911 = vmatpush1.bf16.msra.mxu0 %v879
  %912 = vmatprep.subr.bf16.mxu0 0
  %913 = vmatpush2.bf16.msra.mxu0 0
  %914 = vmatprep.subr.bf16.mxu0 0
  %915 = vmatpush2.bf16.msra.mxu0 0
  %916 = vmatprep.subr.bf16.mxu0 0
  %917 = vmatpush2.bf16.msra.mxu0 0
  %918 = vmatprep.subr.bf16.mxu0 0
  %919 = vmatpush2.bf16.msra.mxu0 0
  %920 = vmatprep.subr.bf16.mxu0 0
  %921 = vmatpush2.bf16.msra.mxu0 0
  %922 = vmatprep.subr.bf16.mxu0 0
  %923 = vmatpush2.bf16.msra.mxu0 0
  %924 = vmatprep.subr.bf16.mxu0 0
  %925 = vmatpush2.bf16.msra.mxu0 0
  %926 = vmatprep.subr.bf16.mxu0 0
  %927 = vmatpush2.bf16.msra.mxu0 0
  %928 = vmatprep.mubr.bf16.mxu0 0
  %929 = vmatmul.mubr.bf16.gmra.mxu0 %v876
  %v930 = vpop.f32.mrf.mxu0
  %v931 = vadd.f32 0.0, %v930
  %v932 = vpop.f32.mrf.mxu0
  %v933 = vadd.f32 0.0, %v932
  %v934 = vpop.f32.mrf.mxu0
  %v935 = vpop.f32.mrf.mxu0
  %936 = vdwg.mxu0
  %937 = vmatprep.subr.bf16.mxu0 0
  %938 = vmatpush1.bf16.msra.mxu0 0
  %939 = vmatprep.subr.bf16.mxu0 0
  %940 = vmatpush1.bf16.msra.mxu0 0
  %941 = vmatprep.subr.bf16.mxu0 0
  %942 = vmatpush1.bf16.msra.mxu0 0
  %943 = vmatprep.subr.bf16.mxu0 0
  %944 = vmatpush1.bf16.msra.mxu0 0
  %945 = vmatprep.subr.bf16.mxu0 0
  %946 = vmatpush1.bf16.msra.mxu0 0
  %947 = vmatprep.subr.bf16.mxu0 0
  %948 = vmatpush1.bf16.msra.mxu0 0
  %949 = vmatprep.subr.bf16.mxu0 0
  %950 = vmatpush1.bf16.msra.mxu0 0
  %951 = vmatprep.subr.bf16.mxu0 %v888
  %952 = vmatpush1.bf16.msra.mxu0 %v885
  %953 = vmatprep.subr.bf16.mxu0 0
  %954 = vmatpush2.bf16.msra.mxu0 0
  %955 = vmatprep.subr.bf16.mxu0 0
  %956 = vmatpush2.bf16.msra.mxu0 0
  %957 = vmatprep.subr.bf16.mxu0 0
  %958 = vmatpush2.bf16.msra.mxu0 0
  %959 = vmatprep.subr.bf16.mxu0 0
  %960 = vmatpush2.bf16.msra.mxu0 0
  %961 = vmatprep.subr.bf16.mxu0 0
  %962 = vmatpush2.bf16.msra.mxu0 0
  %963 = vmatprep.subr.bf16.mxu0 0
  %964 = vmatpush2.bf16.msra.mxu0 0
  %965 = vmatprep.subr.bf16.mxu0 0
  %966 = vmatpush2.bf16.msra.mxu0 0
  %967 = vmatprep.subr.bf16.mxu0 0
  %968 = vmatpush2.bf16.msra.mxu0 0
  %969 = vmatprep.mubr.bf16.mxu0 0
  %970 = vmatmul.mubr.bf16.gmra.mxu0 %v876
  %v971 = vpop.f32.mrf.mxu0
  %v972 = vadd.f32 0.0, %v971
  %v973 = vpop.f32.mrf.mxu0
  %v974 = vadd.f32 0.0, %v973
  %v975 = vpop.f32.mrf.mxu0
  %v976 = vpop.f32.mrf.mxu0
  %977 = vdwg.mxu0
  %978 = vmatprep.subr.bf16.mxu0 0
  %979 = vmatpush1.bf16.msra.mxu0 0
  %980 = vmatprep.subr.bf16.mxu0 0
  %981 = vmatpush1.bf16.msra.mxu0 0
  %982 = vmatprep.subr.bf16.mxu0 0
  %983 = vmatpush1.bf16.msra.mxu0 0
  %984 = vmatprep.subr.bf16.mxu0 0
  %985 = vmatpush1.bf16.msra.mxu0 0
  %986 = vmatprep.subr.bf16.mxu0 0
  %987 = vmatpush1.bf16.msra.mxu0 0
  %988 = vmatprep.subr.bf16.mxu0 0
  %989 = vmatpush1.bf16.msra.mxu0 0
  %990 = vmatprep.subr.bf16.mxu0 0
  %991 = vmatpush1.bf16.msra.mxu0 0
  %992 = vmatprep.subr.bf16.mxu0 %v894
  %993 = vmatpush1.bf16.msra.mxu0 %v891
  %994 = vmatprep.subr.bf16.mxu0 0
  %995 = vmatpush2.bf16.msra.mxu0 0
  %996 = vmatprep.subr.bf16.mxu0 0
  %997 = vmatpush2.bf16.msra.mxu0 0
  %998 = vmatprep.subr.bf16.mxu0 0
  %999 = vmatpush2.bf16.msra.mxu0 0
  %1000 = vmatprep.subr.bf16.mxu0 0
  %1001 = vmatpush2.bf16.msra.mxu0 0
  %1002 = vmatprep.subr.bf16.mxu0 0
  %1003 = vmatpush2.bf16.msra.mxu0 0
  %1004 = vmatprep.subr.bf16.mxu0 0
  %1005 = vmatpush2.bf16.msra.mxu0 0
  %1006 = vmatprep.subr.bf16.mxu0 0
  %1007 = vmatpush2.bf16.msra.mxu0 0
  %1008 = vmatprep.subr.bf16.mxu0 0
  %1009 = vmatpush2.bf16.msra.mxu0 0
  %1010 = vmatprep.mubr.bf16.mxu0 0
  %1011 = vmatmul.mubr.bf16.gmra.mxu0 %v876
  %v1012 = vpop.f32.mrf.mxu0
  %v1013 = vadd.f32 0.0, %v1012
  %v1014 = vpop.f32.mrf.mxu0
  %v1015 = vadd.f32 0.0, %v1014
  %v1016 = vpop.f32.mrf.mxu0
  %v1017 = vpop.f32.mrf.mxu0
  %1018 = vdwg.mxu0
  %v1019 = vadd.f32 %v809, %v931
  %v1020 = vadd.f32 %v810, %v933
  %v1021 = vadd.f32 %v811, %v972
  %v1022 = vadd.f32 %v812, %v974
  %v1023 = vadd.f32 %v813, %v1013
  %v1024 = vadd.f32 %v814, %v1015
  %v1025 = vld [vmem:[%s0] sm:$0xff]
  %v1026 = vld [vmem:[%s0 + $0x8] sm:$0x3f]
  %s1027 = scalar_lea.vmem %s1, 20
  %v1028 = vld [vmem:[%s1027] sm:$0xf]
  %v1031 = vcombine.high %v1025, %v1025
  %v1033 = vunpack.c.l.s4 1983009808
  %v1034 = vunpack.c.0.s8 %v1033
  %v1035 = vlaneseq
  %v1036 = vshrl.u32 %v1035, 7
  %v1037 = vsub.s32 %v1034, %v1036
  %v1038 = vrot.slane %v1025, %v1037
  %v1040 = vunpack.c.l.s4 1983009808
  %v1041 = vunpack.c.0.s8 %v1040
  %v1042 = vlaneseq
  %v1043 = vshrl.u32 %v1042, 7
  %v1044 = vsub.s32 %v1041, %v1043
  %v1045 = vrot.slane %v1031, %v1044
  %v1046 = vcombine.high %v1038, %v1038
  %v1047 = vcombine.high %v1045, %v1045
  %v1048 = vcombine.high %v1026, %v1026
  %v1050 = vunpack.c.l.s4 1983009808
  %v1051 = vunpack.c.0.s8 %v1050
  %v1052 = vlaneseq
  %v1053 = vshrl.u32 %v1052, 7
  %v1054 = vsub.s32 %v1051, %v1053
  %v1055 = vrot.slane %v1026, %v1054
  %v1057 = vunpack.c.l.s4 1983009808
  %v1058 = vunpack.c.0.s8 %v1057
  %v1059 = vlaneseq
  %v1060 = vshrl.u32 %v1059, 7
  %v1061 = vsub.s32 %v1058, %v1060
  %v1062 = vrot.slane %v1048, %v1061
  %v1063 = vcombine.high %v1055, %v1055
  %1064 = vrot.lane.b32.xlu0 %v1038, 108
  %v1065 = vpop.permute.xlu0 %1064
  %1066 = vrot.lane.b32.xlu0 %v1046, 108
  %v1067 = vpop.permute.xlu0 %1066
  %1068 = vrot.lane.b32.xlu0 %v1045, 108
  %v1069 = vpop.permute.xlu0 %1068
  %1070 = vrot.lane.b32.xlu0 %v1047, 108
  %v1071 = vpop.permute.xlu0 %1070
  %1072 = vrot.lane.b32.xlu0 %v1055, 108
  %v1073 = vpop.permute.xlu0 %1072
  %1074 = vrot.lane.b32.xlu0 %v1063, 108
  %v1075 = vpop.permute.xlu0 %1074
  %1076 = vrot.lane.b32.xlu0 %v1062, 108
  %v1077 = vpop.permute.xlu0 %1076
  %vm1078 = vcmask 883712
  %v1079 = vsel %vm1078, %v1065, %v1067
  %v1080 = vsel %vm1078, %v1067, %v1069
  %v1081 = vsel %vm1078, %v1069, %v1071
  %v1082 = vsel %vm1078, %v1071, %v1073
  %v1083 = vsel %vm1078, %v1073, %v1075
  %v1084 = vsel %vm1078, %v1075, %v1077
  %v1086 = vsel %vm78, %v1028, 0
  %v1089 = vsel %vm82, %v1079, 0
  %v1092 = vsel %vm82, %v1080, 0
  %v1095 = vsel %vm82, %v1081, 0
  %v1098 = vsel %vm82, %v1082, 0
  %v1101 = vsel %vm82, %v1083, 0
  %v1104 = vsel %vm82, %v1084, 0
  %1106 = vmatprep.subr.bf16.mxu0 0
  %1107 = vmatpush1.bf16.msra.mxu0 0
  %1108 = vmatprep.subr.bf16.mxu0 0
  %1109 = vmatpush1.bf16.msra.mxu0 0
  %1110 = vmatprep.subr.bf16.mxu0 0
  %1111 = vmatpush1.bf16.msra.mxu0 0
  %1112 = vmatprep.subr.bf16.mxu0 0
  %1113 = vmatpush1.bf16.msra.mxu0 0
  %1114 = vmatprep.subr.bf16.mxu0 0
  %1115 = vmatpush1.bf16.msra.mxu0 0
  %1116 = vmatprep.subr.bf16.mxu0 0
  %1117 = vmatpush1.bf16.msra.mxu0 0
  %1118 = vmatprep.subr.bf16.mxu0 0
  %1119 = vmatpush1.bf16.msra.mxu0 0
  %1120 = vmatprep.subr.bf16.mxu0 %v1092
  %1121 = vmatpush1.bf16.msra.mxu0 %v1089
  %1122 = vmatprep.subr.bf16.mxu0 0
  %1123 = vmatpush2.bf16.msra.mxu0 0
  %1124 = vmatprep.subr.bf16.mxu0 0
  %1125 = vmatpush2.bf16.msra.mxu0 0
  %1126 = vmatprep.subr.bf16.mxu0 0
  %1127 = vmatpush2.bf16.msra.mxu0 0
  %1128 = vmatprep.subr.bf16.mxu0 0
  %1129 = vmatpush2.bf16.msra.mxu0 0
  %1130 = vmatprep.subr.bf16.mxu0 0
  %1131 = vmatpush2.bf16.msra.mxu0 0
  %1132 = vmatprep.subr.bf16.mxu0 0
  %1133 = vmatpush2.bf16.msra.mxu0 0
  %1134 = vmatprep.subr.bf16.mxu0 0
  %1135 = vmatpush2.bf16.msra.mxu0 0
  %1136 = vmatprep.subr.bf16.mxu0 0
  %1137 = vmatpush2.bf16.msra.mxu0 0
  %1138 = vmatprep.mubr.bf16.mxu0 0
  %1139 = vmatmul.mubr.bf16.gmra.mxu0 %v1086
  %v1140 = vpop.f32.mrf.mxu0
  %v1141 = vadd.f32 0.0, %v1140
  %v1142 = vpop.f32.mrf.mxu0
  %v1143 = vadd.f32 0.0, %v1142
  %v1144 = vpop.f32.mrf.mxu0
  %v1145 = vpop.f32.mrf.mxu0
  %1146 = vdwg.mxu0
  %1147 = vmatprep.subr.bf16.mxu0 0
  %1148 = vmatpush1.bf16.msra.mxu0 0
  %1149 = vmatprep.subr.bf16.mxu0 0
  %1150 = vmatpush1.bf16.msra.mxu0 0
  %1151 = vmatprep.subr.bf16.mxu0 0
  %1152 = vmatpush1.bf16.msra.mxu0 0
  %1153 = vmatprep.subr.bf16.mxu0 0
  %1154 = vmatpush1.bf16.msra.mxu0 0
  %1155 = vmatprep.subr.bf16.mxu0 0
  %1156 = vmatpush1.bf16.msra.mxu0 0
  %1157 = vmatprep.subr.bf16.mxu0 0
  %1158 = vmatpush1.bf16.msra.mxu0 0
  %1159 = vmatprep.subr.bf16.mxu0 0
  %1160 = vmatpush1.bf16.msra.mxu0 0
  %1161 = vmatprep.subr.bf16.mxu0 %v1098
  %1162 = vmatpush1.bf16.msra.mxu0 %v1095
  %1163 = vmatprep.subr.bf16.mxu0 0
  %1164 = vmatpush2.bf16.msra.mxu0 0
  %1165 = vmatprep.subr.bf16.mxu0 0
  %1166 = vmatpush2.bf16.msra.mxu0 0
  %1167 = vmatprep.subr.bf16.mxu0 0
  %1168 = vmatpush2.bf16.msra.mxu0 0
  %1169 = vmatprep.subr.bf16.mxu0 0
  %1170 = vmatpush2.bf16.msra.mxu0 0
  %1171 = vmatprep.subr.bf16.mxu0 0
  %1172 = vmatpush2.bf16.msra.mxu0 0
  %1173 = vmatprep.subr.bf16.mxu0 0
  %1174 = vmatpush2.bf16.msra.mxu0 0
  %1175 = vmatprep.subr.bf16.mxu0 0
  %1176 = vmatpush2.bf16.msra.mxu0 0
  %1177 = vmatprep.subr.bf16.mxu0 0
  %1178 = vmatpush2.bf16.msra.mxu0 0
  %1179 = vmatprep.mubr.bf16.mxu0 0
  %1180 = vmatmul.mubr.bf16.gmra.mxu0 %v1086
  %v1181 = vpop.f32.mrf.mxu0
  %v1182 = vadd.f32 0.0, %v1181
  %v1183 = vpop.f32.mrf.mxu0
  %v1184 = vadd.f32 0.0, %v1183
  %v1185 = vpop.f32.mrf.mxu0
  %v1186 = vpop.f32.mrf.mxu0
  %1187 = vdwg.mxu0
  %1188 = vmatprep.subr.bf16.mxu0 0
  %1189 = vmatpush1.bf16.msra.mxu0 0
  %1190 = vmatprep.subr.bf16.mxu0 0
  %1191 = vmatpush1.bf16.msra.mxu0 0
  %1192 = vmatprep.subr.bf16.mxu0 0
  %1193 = vmatpush1.bf16.msra.mxu0 0
  %1194 = vmatprep.subr.bf16.mxu0 0
  %1195 = vmatpush1.bf16.msra.mxu0 0
  %1196 = vmatprep.subr.bf16.mxu0 0
  %1197 = vmatpush1.bf16.msra.mxu0 0
  %1198 = vmatprep.subr.bf16.mxu0 0
  %1199 = vmatpush1.bf16.msra.mxu0 0
  %1200 = vmatprep.subr.bf16.mxu0 0
  %1201 = vmatpush1.bf16.msra.mxu0 0
  %1202 = vmatprep.subr.bf16.mxu0 %v1104
  %1203 = vmatpush1.bf16.msra.mxu0 %v1101
  %1204 = vmatprep.subr.bf16.mxu0 0
  %1205 = vmatpush2.bf16.msra.mxu0 0
  %1206 = vmatprep.subr.bf16.mxu0 0
  %1207 = vmatpush2.bf16.msra.mxu0 0
  %1208 = vmatprep.subr.bf16.mxu0 0
  %1209 = vmatpush2.bf16.msra.mxu0 0
  %1210 = vmatprep.subr.bf16.mxu0 0
  %1211 = vmatpush2.bf16.msra.mxu0 0
  %1212 = vmatprep.subr.bf16.mxu0 0
  %1213 = vmatpush2.bf16.msra.mxu0 0
  %1214 = vmatprep.subr.bf16.mxu0 0
  %1215 = vmatpush2.bf16.msra.mxu0 0
  %1216 = vmatprep.subr.bf16.mxu0 0
  %1217 = vmatpush2.bf16.msra.mxu0 0
  %1218 = vmatprep.subr.bf16.mxu0 0
  %1219 = vmatpush2.bf16.msra.mxu0 0
  %1220 = vmatprep.mubr.bf16.mxu0 0
  %1221 = vmatmul.mubr.bf16.gmra.mxu0 %v1086
  %v1222 = vpop.f32.mrf.mxu0
  %v1223 = vadd.f32 0.0, %v1222
  %v1224 = vpop.f32.mrf.mxu0
  %v1225 = vadd.f32 0.0, %v1224
  %v1226 = vpop.f32.mrf.mxu0
  %v1227 = vpop.f32.mrf.mxu0
  %1228 = vdwg.mxu0
  %v1229 = vadd.f32 %v1019, %v1141
  %v1230 = vadd.f32 %v1020, %v1143
  %v1231 = vadd.f32 %v1021, %v1182
  %v1232 = vadd.f32 %v1022, %v1184
  %v1233 = vadd.f32 %v1023, %v1223
  %v1234 = vadd.f32 %v1024, %v1225
  %v1235 = vld [vmem:[%s0] sm:$0xff]
  %v1236 = vld [vmem:[%s0 + $0x8] sm:$0x3f]
  %s1237 = scalar_lea.vmem %s1, 24
  %v1238 = vld [vmem:[%s1237] sm:$0xf]
  %v1241 = vcombine.high %v1235, %v1235
  %v1243 = vunpack.c.l.s4 1983009808
  %v1244 = vunpack.c.0.s8 %v1243
  %v1245 = vlaneseq
  %v1246 = vshrl.u32 %v1245, 7
  %v1247 = vsub.s32 %v1244, %v1246
  %v1248 = vrot.slane %v1235, %v1247
  %v1250 = vunpack.c.l.s4 1983009808
  %v1251 = vunpack.c.0.s8 %v1250
  %v1252 = vlaneseq
  %v1253 = vshrl.u32 %v1252, 7
  %v1254 = vsub.s32 %v1251, %v1253
  %v1255 = vrot.slane %v1241, %v1254
  %v1256 = vcombine.high %v1248, %v1248
  %v1257 = vcombine.high %v1255, %v1255
  %v1258 = vcombine.high %v1236, %v1236
  %v1260 = vunpack.c.l.s4 1983009808
  %v1261 = vunpack.c.0.s8 %v1260
  %v1262 = vlaneseq
  %v1263 = vshrl.u32 %v1262, 7
  %v1264 = vsub.s32 %v1261, %v1263
  %v1265 = vrot.slane %v1236, %v1264
  %v1267 = vunpack.c.l.s4 1983009808
  %v1268 = vunpack.c.0.s8 %v1267
  %v1269 = vlaneseq
  %v1270 = vshrl.u32 %v1269, 7
  %v1271 = vsub.s32 %v1268, %v1270
  %v1272 = vrot.slane %v1258, %v1271
  %v1273 = vcombine.high %v1265, %v1265
  %1274 = vrot.lane.b32.xlu0 %v1248, 92
  %v1275 = vpop.permute.xlu0 %1274
  %1276 = vrot.lane.b32.xlu0 %v1256, 92
  %v1277 = vpop.permute.xlu0 %1276
  %1278 = vrot.lane.b32.xlu0 %v1255, 92
  %v1279 = vpop.permute.xlu0 %1278
  %1280 = vrot.lane.b32.xlu0 %v1257, 92
  %v1281 = vpop.permute.xlu0 %1280
  %1282 = vrot.lane.b32.xlu0 %v1265, 92
  %v1283 = vpop.permute.xlu0 %1282
  %1284 = vrot.lane.b32.xlu0 %v1273, 92
  %v1285 = vpop.permute.xlu0 %1284
  %1286 = vrot.lane.b32.xlu0 %v1272, 92
  %v1287 = vpop.permute.xlu0 %1286
  %vm1288 = vcmask 752640
  %v1289 = vsel %vm1288, %v1275, %v1277
  %v1290 = vsel %vm1288, %v1277, %v1279
  %v1291 = vsel %vm1288, %v1279, %v1281
  %v1292 = vsel %vm1288, %v1281, %v1283
  %v1293 = vsel %vm1288, %v1283, %v1285
  %v1294 = vsel %vm1288, %v1285, %v1287
  %v1296 = vsel %vm78, %v1238, 0
  %v1299 = vsel %vm82, %v1289, 0
  %v1302 = vsel %vm82, %v1290, 0
  %v1305 = vsel %vm82, %v1291, 0
  %v1308 = vsel %vm82, %v1292, 0
  %v1311 = vsel %vm82, %v1293, 0
  %v1314 = vsel %vm82, %v1294, 0
  %1316 = vmatprep.subr.bf16.mxu0 0
  %1317 = vmatpush1.bf16.msra.mxu0 0
  %1318 = vmatprep.subr.bf16.mxu0 0
  %1319 = vmatpush1.bf16.msra.mxu0 0
  %1320 = vmatprep.subr.bf16.mxu0 0
  %1321 = vmatpush1.bf16.msra.mxu0 0
  %1322 = vmatprep.subr.bf16.mxu0 0
  %1323 = vmatpush1.bf16.msra.mxu0 0
  %1324 = vmatprep.subr.bf16.mxu0 0
  %1325 = vmatpush1.bf16.msra.mxu0 0
  %1326 = vmatprep.subr.bf16.mxu0 0
  %1327 = vmatpush1.bf16.msra.mxu0 0
  %1328 = vmatprep.subr.bf16.mxu0 0
  %1329 = vmatpush1.bf16.msra.mxu0 0
  %1330 = vmatprep.subr.bf16.mxu0 %v1302
  %1331 = vmatpush1.bf16.msra.mxu0 %v1299
  %1332 = vmatprep.subr.bf16.mxu0 0
  %1333 = vmatpush2.bf16.msra.mxu0 0
  %1334 = vmatprep.subr.bf16.mxu0 0
  %1335 = vmatpush2.bf16.msra.mxu0 0
  %1336 = vmatprep.subr.bf16.mxu0 0
  %1337 = vmatpush2.bf16.msra.mxu0 0
  %1338 = vmatprep.subr.bf16.mxu0 0
  %1339 = vmatpush2.bf16.msra.mxu0 0
  %1340 = vmatprep.subr.bf16.mxu0 0
  %1341 = vmatpush2.bf16.msra.mxu0 0
  %1342 = vmatprep.subr.bf16.mxu0 0
  %1343 = vmatpush2.bf16.msra.mxu0 0
  %1344 = vmatprep.subr.bf16.mxu0 0
  %1345 = vmatpush2.bf16.msra.mxu0 0
  %1346 = vmatprep.subr.bf16.mxu0 0
  %1347 = vmatpush2.bf16.msra.mxu0 0
  %1348 = vmatprep.mubr.bf16.mxu0 0
  %1349 = vmatmul.mubr.bf16.gmra.mxu0 %v1296
  %v1350 = vpop.f32.mrf.mxu0
  %v1351 = vadd.f32 0.0, %v1350
  %v1352 = vpop.f32.mrf.mxu0
  %v1353 = vadd.f32 0.0, %v1352
  %v1354 = vpop.f32.mrf.mxu0
  %v1355 = vpop.f32.mrf.mxu0
  %1356 = vdwg.mxu0
  %1357 = vmatprep.subr.bf16.mxu0 0
  %1358 = vmatpush1.bf16.msra.mxu0 0
  %1359 = vmatprep.subr.bf16.mxu0 0
  %1360 = vmatpush1.bf16.msra.mxu0 0
  %1361 = vmatprep.subr.bf16.mxu0 0
  %1362 = vmatpush1.bf16.msra.mxu0 0
  %1363 = vmatprep.subr.bf16.mxu0 0
  %1364 = vmatpush1.bf16.msra.mxu0 0
  %1365 = vmatprep.subr.bf16.mxu0 0
  %1366 = vmatpush1.bf16.msra.mxu0 0
  %1367 = vmatprep.subr.bf16.mxu0 0
  %1368 = vmatpush1.bf16.msra.mxu0 0
  %1369 = vmatprep.subr.bf16.mxu0 0
  %1370 = vmatpush1.bf16.msra.mxu0 0
  %1371 = vmatprep.subr.bf16.mxu0 %v1308
  %1372 = vmatpush1.bf16.msra.mxu0 %v1305
  %1373 = vmatprep.subr.bf16.mxu0 0
  %1374 = vmatpush2.bf16.msra.mxu0 0
  %1375 = vmatprep.subr.bf16.mxu0 0
  %1376 = vmatpush2.bf16.msra.mxu0 0
  %1377 = vmatprep.subr.bf16.mxu0 0
  %1378 = vmatpush2.bf16.msra.mxu0 0
  %1379 = vmatprep.subr.bf16.mxu0 0
  %1380 = vmatpush2.bf16.msra.mxu0 0
  %1381 = vmatprep.subr.bf16.mxu0 0
  %1382 = vmatpush2.bf16.msra.mxu0 0
  %1383 = vmatprep.subr.bf16.mxu0 0
  %1384 = vmatpush2.bf16.msra.mxu0 0
  %1385 = vmatprep.subr.bf16.mxu0 0
  %1386 = vmatpush2.bf16.msra.mxu0 0
  %1387 = vmatprep.subr.bf16.mxu0 0
  %1388 = vmatpush2.bf16.msra.mxu0 0
  %1389 = vmatprep.mubr.bf16.mxu0 0
  %1390 = vmatmul.mubr.bf16.gmra.mxu0 %v1296
  %v1391 = vpop.f32.mrf.mxu0
  %v1392 = vadd.f32 0.0, %v1391
  %v1393 = vpop.f32.mrf.mxu0
  %v1394 = vadd.f32 0.0, %v1393
  %v1395 = vpop.f32.mrf.mxu0
  %v1396 = vpop.f32.mrf.mxu0
  %1397 = vdwg.mxu0
  %1398 = vmatprep.subr.bf16.mxu0 0
  %1399 = vmatpush1.bf16.msra.mxu0 0
  %1400 = vmatprep.subr.bf16.mxu0 0
  %1401 = vmatpush1.bf16.msra.mxu0 0
  %1402 = vmatprep.subr.bf16.mxu0 0
  %1403 = vmatpush1.bf16.msra.mxu0 0
  %1404 = vmatprep.subr.bf16.mxu0 0
  %1405 = vmatpush1.bf16.msra.mxu0 0
  %1406 = vmatprep.subr.bf16.mxu0 0
  %1407 = vmatpush1.bf16.msra.mxu0 0
  %1408 = vmatprep.subr.bf16.mxu0 0
  %1409 = vmatpush1.bf16.msra.mxu0 0
  %1410 = vmatprep.subr.bf16.mxu0 0
  %1411 = vmatpush1.bf16.msra.mxu0 0
  %1412 = vmatprep.subr.bf16.mxu0 %v1314
  %1413 = vmatpush1.bf16.msra.mxu0 %v1311
  %1414 = vmatprep.subr.bf16.mxu0 0
  %1415 = vmatpush2.bf16.msra.mxu0 0
  %1416 = vmatprep.subr.bf16.mxu0 0
  %1417 = vmatpush2.bf16.msra.mxu0 0
  %1418 = vmatprep.subr.bf16.mxu0 0
  %1419 = vmatpush2.bf16.msra.mxu0 0
  %1420 = vmatprep.subr.bf16.mxu0 0
  %1421 = vmatpush2.bf16.msra.mxu0 0
  %1422 = vmatprep.subr.bf16.mxu0 0
  %1423 = vmatpush2.bf16.msra.mxu0 0
  %1424 = vmatprep.subr.bf16.mxu0 0
  %1425 = vmatpush2.bf16.msra.mxu0 0
  %1426 = vmatprep.subr.bf16.mxu0 0
  %1427 = vmatpush2.bf16.msra.mxu0 0
  %1428 = vmatprep.subr.bf16.mxu0 0
  %1429 = vmatpush2.bf16.msra.mxu0 0
  %1430 = vmatprep.mubr.bf16.mxu0 0
  %1431 = vmatmul.mubr.bf16.gmra.mxu0 %v1296
  %v1432 = vpop.f32.mrf.mxu0
  %v1433 = vadd.f32 0.0, %v1432
  %v1434 = vpop.f32.mrf.mxu0
  %v1435 = vadd.f32 0.0, %v1434
  %v1436 = vpop.f32.mrf.mxu0
  %v1437 = vpop.f32.mrf.mxu0
  %1438 = vdwg.mxu0
  %v1439 = vadd.f32 %v1229, %v1351
  %v1440 = vadd.f32 %v1230, %v1353
  %v1441 = vadd.f32 %v1231, %v1392
  %v1442 = vadd.f32 %v1232, %v1394
  %v1443 = vadd.f32 %v1233, %v1433
  %v1444 = vadd.f32 %v1234, %v1435
  %v1445 = vld [vmem:[%s0] sm:$0xff]
  %v1446 = vld [vmem:[%s0 + $0x8] sm:$0x3f]
  %s1447 = scalar_lea.vmem %s1, 28
  %v1448 = vld [vmem:[%s1447] sm:$0xf]
  %v1451 = vcombine.high %v1445, %v1445
  %v1453 = vunpack.c.l.s4 1983009808
  %v1454 = vunpack.c.0.s8 %v1453
  %v1455 = vlaneseq
  %v1456 = vshrl.u32 %v1455, 7
  %v1457 = vsub.s32 %v1454, %v1456
  %v1458 = vrot.slane %v1445, %v1457
  %v1460 = vunpack.c.l.s4 1983009808
  %v1461 = vunpack.c.0.s8 %v1460
  %v1462 = vlaneseq
  %v1463 = vshrl.u32 %v1462, 7
  %v1464 = vsub.s32 %v1461, %v1463
  %v1465 = vrot.slane %v1451, %v1464
  %v1466 = vcombine.high %v1458, %v1458
  %v1467 = vcombine.high %v1465, %v1465
  %v1468 = vcombine.high %v1446, %v1446
  %v1470 = vunpack.c.l.s4 1983009808
  %v1471 = vunpack.c.0.s8 %v1470
  %v1472 = vlaneseq
  %v1473 = vshrl.u32 %v1472, 7
  %v1474 = vsub.s32 %v1471, %v1473
  %v1475 = vrot.slane %v1446, %v1474
  %v1477 = vunpack.c.l.s4 1983009808
  %v1478 = vunpack.c.0.s8 %v1477
  %v1479 = vlaneseq
  %v1480 = vshrl.u32 %v1479, 7
  %v1481 = vsub.s32 %v1478, %v1480
  %v1482 = vrot.slane %v1468, %v1481
  %v1483 = vcombine.high %v1475, %v1475
  %1484 = vrot.lane.b32.xlu0 %v1458, 91
  %v1485 = vpop.permute.xlu0 %1484
  %1486 = vrot.lane.b32.xlu0 %v1466, 91
  %v1487 = vpop.permute.xlu0 %1486
  %1488 = vrot.lane.b32.xlu0 %v1465, 91
  %v1489 = vpop.permute.xlu0 %1488
  %1490 = vrot.lane.b32.xlu0 %v1467, 91
  %v1491 = vpop.permute.xlu0 %1490
  %1492 = vrot.lane.b32.xlu0 %v1475, 91
  %v1493 = vpop.permute.xlu0 %1492
  %1494 = vrot.lane.b32.xlu0 %v1483, 91
  %v1495 = vpop.permute.xlu0 %1494
  %1496 = vrot.lane.b32.xlu0 %v1482, 91
  %v1497 = vpop.permute.xlu0 %1496
  %vm1498 = vcmask 744448
  %v1499 = vsel %vm1498, %v1485, %v1487
  %v1500 = vsel %vm1498, %v1487, %v1489
  %v1501 = vsel %vm1498, %v1489, %v1491
  %v1502 = vsel %vm1498, %v1491, %v1493
  %v1503 = vsel %vm1498, %v1493, %v1495
  %v1504 = vsel %vm1498, %v1495, %v1497
  %v1506 = vsel %vm78, %v1448, 0
  %v1509 = vsel %vm82, %v1499, 0
  %v1512 = vsel %vm82, %v1500, 0
  %v1515 = vsel %vm82, %v1501, 0
  %v1518 = vsel %vm82, %v1502, 0
  %v1521 = vsel %vm82, %v1503, 0
  %v1524 = vsel %vm82, %v1504, 0
  %1526 = vmatprep.subr.bf16.mxu0 0
  %1527 = vmatpush1.bf16.msra.mxu0 0
  %1528 = vmatprep.subr.bf16.mxu0 0
  %1529 = vmatpush1.bf16.msra.mxu0 0
  %1530 = vmatprep.subr.bf16.mxu0 0
  %1531 = vmatpush1.bf16.msra.mxu0 0
  %1532 = vmatprep.subr.bf16.mxu0 0
  %1533 = vmatpush1.bf16.msra.mxu0 0
  %1534 = vmatprep.subr.bf16.mxu0 0
  %1535 = vmatpush1.bf16.msra.mxu0 0
  %1536 = vmatprep.subr.bf16.mxu0 0
  %1537 = vmatpush1.bf16.msra.mxu0 0
  %1538 = vmatprep.subr.bf16.mxu0 0
  %1539 = vmatpush1.bf16.msra.mxu0 0
  %1540 = vmatprep.subr.bf16.mxu0 %v1512
  %1541 = vmatpush1.bf16.msra.mxu0 %v1509
  %1542 = vmatprep.subr.bf16.mxu0 0
  %1543 = vmatpush2.bf16.msra.mxu0 0
  %1544 = vmatprep.subr.bf16.mxu0 0
  %1545 = vmatpush2.bf16.msra.mxu0 0
  %1546 = vmatprep.subr.bf16.mxu0 0
  %1547 = vmatpush2.bf16.msra.mxu0 0
  %1548 = vmatprep.subr.bf16.mxu0 0
  %1549 = vmatpush2.bf16.msra.mxu0 0
  %1550 = vmatprep.subr.bf16.mxu0 0
  %1551 = vmatpush2.bf16.msra.mxu0 0
  %1552 = vmatprep.subr.bf16.mxu0 0
  %1553 = vmatpush2.bf16.msra.mxu0 0
  %1554 = vmatprep.subr.bf16.mxu0 0
  %1555 = vmatpush2.bf16.msra.mxu0 0
  %1556 = vmatprep.subr.bf16.mxu0 0
  %1557 = vmatpush2.bf16.msra.mxu0 0
  %1558 = vmatprep.mubr.bf16.mxu0 0
  %1559 = vmatmul.mubr.bf16.gmra.mxu0 %v1506
  %v1560 = vpop.f32.mrf.mxu0
  %v1561 = vadd.f32 0.0, %v1560
  %v1562 = vpop.f32.mrf.mxu0
  %v1563 = vadd.f32 0.0, %v1562
  %v1564 = vpop.f32.mrf.mxu0
  %v1565 = vpop.f32.mrf.mxu0
  %1566 = vdwg.mxu0
  %1567 = vmatprep.subr.bf16.mxu0 0
  %1568 = vmatpush1.bf16.msra.mxu0 0
  %1569 = vmatprep.subr.bf16.mxu0 0
  %1570 = vmatpush1.bf16.msra.mxu0 0
  %1571 = vmatprep.subr.bf16.mxu0 0
  %1572 = vmatpush1.bf16.msra.mxu0 0
  %1573 = vmatprep.subr.bf16.mxu0 0
  %1574 = vmatpush1.bf16.msra.mxu0 0
  %1575 = vmatprep.subr.bf16.mxu0 0
  %1576 = vmatpush1.bf16.msra.mxu0 0
  %1577 = vmatprep.subr.bf16.mxu0 0
  %1578 = vmatpush1.bf16.msra.mxu0 0
  %1579 = vmatprep.subr.bf16.mxu0 0
  %1580 = vmatpush1.bf16.msra.mxu0 0
  %1581 = vmatprep.subr.bf16.mxu0 %v1518
  %1582 = vmatpush1.bf16.msra.mxu0 %v1515
  %1583 = vmatprep.subr.bf16.mxu0 0
  %1584 = vmatpush2.bf16.msra.mxu0 0
  %1585 = vmatprep.subr.bf16.mxu0 0
  %1586 = vmatpush2.bf16.msra.mxu0 0
  %1587 = vmatprep.subr.bf16.mxu0 0
  %1588 = vmatpush2.bf16.msra.mxu0 0
  %1589 = vmatprep.subr.bf16.mxu0 0
  %1590 = vmatpush2.bf16.msra.mxu0 0
  %1591 = vmatprep.subr.bf16.mxu0 0
  %1592 = vmatpush2.bf16.msra.mxu0 0
  %1593 = vmatprep.subr.bf16.mxu0 0
  %1594 = vmatpush2.bf16.msra.mxu0 0
  %1595 = vmatprep.subr.bf16.mxu0 0
  %1596 = vmatpush2.bf16.msra.mxu0 0
  %1597 = vmatprep.subr.bf16.mxu0 0
  %1598 = vmatpush2.bf16.msra.mxu0 0
  %1599 = vmatprep.mubr.bf16.mxu0 0
  %1600 = vmatmul.mubr.bf16.gmra.mxu0 %v1506
  %v1601 = vpop.f32.mrf.mxu0
  %v1602 = vadd.f32 0.0, %v1601
  %v1603 = vpop.f32.mrf.mxu0
  %v1604 = vadd.f32 0.0, %v1603
  %v1605 = vpop.f32.mrf.mxu0
  %v1606 = vpop.f32.mrf.mxu0
  %1607 = vdwg.mxu0
  %1608 = vmatprep.subr.bf16.mxu0 0
  %1609 = vmatpush1.bf16.msra.mxu0 0
  %1610 = vmatprep.subr.bf16.mxu0 0
  %1611 = vmatpush1.bf16.msra.mxu0 0
  %1612 = vmatprep.subr.bf16.mxu0 0
  %1613 = vmatpush1.bf16.msra.mxu0 0
  %1614 = vmatprep.subr.bf16.mxu0 0
  %1615 = vmatpush1.bf16.msra.mxu0 0
  %1616 = vmatprep.subr.bf16.mxu0 0
  %1617 = vmatpush1.bf16.msra.mxu0 0
  %1618 = vmatprep.subr.bf16.mxu0 0
  %1619 = vmatpush1.bf16.msra.mxu0 0
  %1620 = vmatprep.subr.bf16.mxu0 0
  %1621 = vmatpush1.bf16.msra.mxu0 0
  %1622 = vmatprep.subr.bf16.mxu0 %v1524
  %1623 = vmatpush1.bf16.msra.mxu0 %v1521
  %1624 = vmatprep.subr.bf16.mxu0 0
  %1625 = vmatpush2.bf16.msra.mxu0 0
  %1626 = vmatprep.subr.bf16.mxu0 0
  %1627 = vmatpush2.bf16.msra.mxu0 0
  %1628 = vmatprep.subr.bf16.mxu0 0
  %1629 = vmatpush2.bf16.msra.mxu0 0
  %1630 = vmatprep.subr.bf16.mxu0 0
  %1631 = vmatpush2.bf16.msra.mxu0 0
  %1632 = vmatprep.subr.bf16.mxu0 0
  %1633 = vmatpush2.bf16.msra.mxu0 0
  %1634 = vmatprep.subr.bf16.mxu0 0
  %1635 = vmatpush2.bf16.msra.mxu0 0
  %1636 = vmatprep.subr.bf16.mxu0 0
  %1637 = vmatpush2.bf16.msra.mxu0 0
  %1638 = vmatprep.subr.bf16.mxu0 0
  %1639 = vmatpush2.bf16.msra.mxu0 0
  %1640 = vmatprep.mubr.bf16.mxu0 0
  %1641 = vmatmul.mubr.bf16.gmra.mxu0 %v1506
  %v1642 = vpop.f32.mrf.mxu0
  %v1643 = vadd.f32 0.0, %v1642
  %v1644 = vpop.f32.mrf.mxu0
  %v1645 = vadd.f32 0.0, %v1644
  %v1646 = vpop.f32.mrf.mxu0
  %v1647 = vpop.f32.mrf.mxu0
  %1648 = vdwg.mxu0
  %v1649 = vadd.f32 %v1439, %v1561
  %v1650 = vadd.f32 %v1440, %v1563
  %v1651 = vadd.f32 %v1441, %v1602
  %v1652 = vadd.f32 %v1442, %v1604
  %v1653 = vadd.f32 %v1443, %v1643
  %v1654 = vadd.f32 %v1444, %v1645
  %v1655 = vld [vmem:[%s0] sm:$0xff]
  %v1656 = vld [vmem:[%s0 + $0x8] sm:$0x3f]
  %s1657 = scalar_lea.vmem %s1, 32
  %v1658 = vld [vmem:[%s1657] sm:$0xf]
  %v1661 = vcombine.high %v1655, %v1655
  %v1663 = vunpack.c.l.s4 1983009808
  %v1664 = vunpack.c.0.s8 %v1663
  %v1665 = vlaneseq
  %v1666 = vshrl.u32 %v1665, 7
  %v1667 = vsub.s32 %v1664, %v1666
  %v1668 = vrot.slane %v1655, %v1667
  %v1670 = vunpack.c.l.s4 1983009808
  %v1671 = vunpack.c.0.s8 %v1670
  %v1672 = vlaneseq
  %v1673 = vshrl.u32 %v1672, 7
  %v1674 = vsub.s32 %v1671, %v1673
  %v1675 = vrot.slane %v1661, %v1674
  %v1676 = vcombine.high %v1668, %v1668
  %v1677 = vcombine.high %v1675, %v1675
  %v1678 = vcombine.high %v1656, %v1656
  %v1680 = vunpack.c.l.s4 1983009808
  %v1681 = vunpack.c.0.s8 %v1680
  %v1682 = vlaneseq
  %v1683 = vshrl.u32 %v1682, 7
  %v1684 = vsub.s32 %v1681, %v1683
  %v1685 = vrot.slane %v1656, %v1684
  %v1687 = vunpack.c.l.s4 1983009808
  %v1688 = vunpack.c.0.s8 %v1687
  %v1689 = vlaneseq
  %v1690 = vshrl.u32 %v1689, 7
  %v1691 = vsub.s32 %v1688, %v1690
  %v1692 = vrot.slane %v1678, %v1691
  %v1693 = vcombine.high %v1685, %v1685
  %1694 = vrot.lane.b32.xlu0 %v1668, 90
  %v1695 = vpop.permute.xlu0 %1694
  %1696 = vrot.lane.b32.xlu0 %v1676, 90
  %v1697 = vpop.permute.xlu0 %1696
  %1698 = vrot.lane.b32.xlu0 %v1675, 90
  %v1699 = vpop.permute.xlu0 %1698
  %1700 = vrot.lane.b32.xlu0 %v1677, 90
  %v1701 = vpop.permute.xlu0 %1700
  %1702 = vrot.lane.b32.xlu0 %v1685, 90
  %v1703 = vpop.permute.xlu0 %1702
  %1704 = vrot.lane.b32.xlu0 %v1693, 90
  %v1705 = vpop.permute.xlu0 %1704
  %1706 = vrot.lane.b32.xlu0 %v1692, 90
  %v1707 = vpop.permute.xlu0 %1706
  %vm1708 = vcmask 736256
  %v1709 = vsel %vm1708, %v1695, %v1697
  %v1710 = vsel %vm1708, %v1697, %v1699
  %v1711 = vsel %vm1708, %v1699, %v1701
  %v1712 = vsel %vm1708, %v1701, %v1703
  %v1713 = vsel %vm1708, %v1703, %v1705
  %v1714 = vsel %vm1708, %v1705, %v1707
  %v1716 = vsel %vm78, %v1658, 0
  %v1719 = vsel %vm82, %v1709, 0
  %v1722 = vsel %vm82, %v1710, 0
  %v1725 = vsel %vm82, %v1711, 0
  %v1728 = vsel %vm82, %v1712, 0
  %v1731 = vsel %vm82, %v1713, 0
  %v1734 = vsel %vm82, %v1714, 0
  %1736 = vmatprep.subr.bf16.mxu0 0
  %1737 = vmatpush1.bf16.msra.mxu0 0
  %1738 = vmatprep.subr.bf16.mxu0 0
  %1739 = vmatpush1.bf16.msra.mxu0 0
  %1740 = vmatprep.subr.bf16.mxu0 0
  %1741 = vmatpush1.bf16.msra.mxu0 0
  %1742 = vmatprep.subr.bf16.mxu0 0
  %1743 = vmatpush1.bf16.msra.mxu0 0
  %1744 = vmatprep.subr.bf16.mxu0 0
  %1745 = vmatpush1.bf16.msra.mxu0 0
  %1746 = vmatprep.subr.bf16.mxu0 0
  %1747 = vmatpush1.bf16.msra.mxu0 0
  %1748 = vmatprep.subr.bf16.mxu0 0
  %1749 = vmatpush1.bf16.msra.mxu0 0
  %1750 = vmatprep.subr.bf16.mxu0 %v1722
  %1751 = vmatpush1.bf16.msra.mxu0 %v1719
  %1752 = vmatprep.subr.bf16.mxu0 0
  %1753 = vmatpush2.bf16.msra.mxu0 0
  %1754 = vmatprep.subr.bf16.mxu0 0
  %1755 = vmatpush2.bf16.msra.mxu0 0
  %1756 = vmatprep.subr.bf16.mxu0 0
  %1757 = vmatpush2.bf16.msra.mxu0 0
  %1758 = vmatprep.subr.bf16.mxu0 0
  %1759 = vmatpush2.bf16.msra.mxu0 0
  %1760 = vmatprep.subr.bf16.mxu0 0
  %1761 = vmatpush2.bf16.msra.mxu0 0
  %1762 = vmatprep.subr.bf16.mxu0 0
  %1763 = vmatpush2.bf16.msra.mxu0 0
  %1764 = vmatprep.subr.bf16.mxu0 0
  %1765 = vmatpush2.bf16.msra.mxu0 0
  %1766 = vmatprep.subr.bf16.mxu0 0
  %1767 = vmatpush2.bf16.msra.mxu0 0
  %1768 = vmatprep.mubr.bf16.mxu0 0
  %1769 = vmatmul.mubr.bf16.gmra.mxu0 %v1716
  %v1770 = vpop.f32.mrf.mxu0
  %v1771 = vadd.f32 0.0, %v1770
  %v1772 = vpop.f32.mrf.mxu0
  %v1773 = vadd.f32 0.0, %v1772
  %v1774 = vpop.f32.mrf.mxu0
  %v1775 = vpop.f32.mrf.mxu0
  %1776 = vdwg.mxu0
  %1777 = vmatprep.subr.bf16.mxu0 0
  %1778 = vmatpush1.bf16.msra.mxu0 0
  %1779 = vmatprep.subr.bf16.mxu0 0
  %1780 = vmatpush1.bf16.msra.mxu0 0
  %1781 = vmatprep.subr.bf16.mxu0 0
  %1782 = vmatpush1.bf16.msra.mxu0 0
  %1783 = vmatprep.subr.bf16.mxu0 0
  %1784 = vmatpush1.bf16.msra.mxu0 0
  %1785 = vmatprep.subr.bf16.mxu0 0
  %1786 = vmatpush1.bf16.msra.mxu0 0
  %1787 = vmatprep.subr.bf16.mxu0 0
  %1788 = vmatpush1.bf16.msra.mxu0 0
  %1789 = vmatprep.subr.bf16.mxu0 0
  %1790 = vmatpush1.bf16.msra.mxu0 0
  %1791 = vmatprep.subr.bf16.mxu0 %v1728
  %1792 = vmatpush1.bf16.msra.mxu0 %v1725
  %1793 = vmatprep.subr.bf16.mxu0 0
  %1794 = vmatpush2.bf16.msra.mxu0 0
  %1795 = vmatprep.subr.bf16.mxu0 0
  %1796 = vmatpush2.bf16.msra.mxu0 0
  %1797 = vmatprep.subr.bf16.mxu0 0
  %1798 = vmatpush2.bf16.msra.mxu0 0
  %1799 = vmatprep.subr.bf16.mxu0 0
  %1800 = vmatpush2.bf16.msra.mxu0 0
  %1801 = vmatprep.subr.bf16.mxu0 0
  %1802 = vmatpush2.bf16.msra.mxu0 0
  %1803 = vmatprep.subr.bf16.mxu0 0
  %1804 = vmatpush2.bf16.msra.mxu0 0
  %1805 = vmatprep.subr.bf16.mxu0 0
  %1806 = vmatpush2.bf16.msra.mxu0 0
  %1807 = vmatprep.subr.bf16.mxu0 0
  %1808 = vmatpush2.bf16.msra.mxu0 0
  %1809 = vmatprep.mubr.bf16.mxu0 0
  %1810 = vmatmul.mubr.bf16.gmra.mxu0 %v1716
  %v1811 = vpop.f32.mrf.mxu0
  %v1812 = vadd.f32 0.0, %v1811
  %v1813 = vpop.f32.mrf.mxu0
  %v1814 = vadd.f32 0.0, %v1813
  %v1815 = vpop.f32.mrf.mxu0
  %v1816 = vpop.f32.mrf.mxu0
  %1817 = vdwg.mxu0
  %1818 = vmatprep.subr.bf16.mxu0 0
  %1819 = vmatpush1.bf16.msra.mxu0 0
  %1820 = vmatprep.subr.bf16.mxu0 0
  %1821 = vmatpush1.bf16.msra.mxu0 0
  %1822 = vmatprep.subr.bf16.mxu0 0
  %1823 = vmatpush1.bf16.msra.mxu0 0
  %1824 = vmatprep.subr.bf16.mxu0 0
  %1825 = vmatpush1.bf16.msra.mxu0 0
  %1826 = vmatprep.subr.bf16.mxu0 0
  %1827 = vmatpush1.bf16.msra.mxu0 0
  %1828 = vmatprep.subr.bf16.mxu0 0
  %1829 = vmatpush1.bf16.msra.mxu0 0
  %1830 = vmatprep.subr.bf16.mxu0 0
  %1831 = vmatpush1.bf16.msra.mxu0 0
  %1832 = vmatprep.subr.bf16.mxu0 %v1734
  %1833 = vmatpush1.bf16.msra.mxu0 %v1731
  %1834 = vmatprep.subr.bf16.mxu0 0
  %1835 = vmatpush2.bf16.msra.mxu0 0
  %1836 = vmatprep.subr.bf16.mxu0 0
  %1837 = vmatpush2.bf16.msra.mxu0 0
  %1838 = vmatprep.subr.bf16.mxu0 0
  %1839 = vmatpush2.bf16.msra.mxu0 0
  %1840 = vmatprep.subr.bf16.mxu0 0
  %1841 = vmatpush2.bf16.msra.mxu0 0
  %1842 = vmatprep.subr.bf16.mxu0 0
  %1843 = vmatpush2.bf16.msra.mxu0 0
  %1844 = vmatprep.subr.bf16.mxu0 0
  %1845 = vmatpush2.bf16.msra.mxu0 0
  %1846 = vmatprep.subr.bf16.mxu0 0
  %1847 = vmatpush2.bf16.msra.mxu0 0
  %1848 = vmatprep.subr.bf16.mxu0 0
  %1849 = vmatpush2.bf16.msra.mxu0 0
  %1850 = vmatprep.mubr.bf16.mxu0 0
  %1851 = vmatmul.mubr.bf16.gmra.mxu0 %v1716
  %v1852 = vpop.f32.mrf.mxu0
  %v1853 = vadd.f32 0.0, %v1852
  %v1854 = vpop.f32.mrf.mxu0
  %v1855 = vadd.f32 0.0, %v1854
  %v1856 = vpop.f32.mrf.mxu0
  %v1857 = vpop.f32.mrf.mxu0
  %1858 = vdwg.mxu0
  %v1859 = vadd.f32 %v1649, %v1771
  %v1860 = vadd.f32 %v1650, %v1773
  %v1861 = vadd.f32 %v1651, %v1812
  %v1862 = vadd.f32 %v1652, %v1814
  %v1863 = vadd.f32 %v1653, %v1853
  %v1864 = vadd.f32 %v1654, %v1855
  %v1865 = vld [vmem:[%s2] sm:$0xff]
  %1867 = vset.pattern.permute.xlu0 0
  %1868 = vperm.xlu0 %1867, %v1865
  %v1869 = vpop.permute.xlu0 %1868
  %v1871 = vadd.f32 %v1859, %v1869
  %v1872 = vadd.f32 %v1860, %v1869
  %v1873 = vadd.f32 %v1861, %v1869
  %v1874 = vadd.f32 %v1862, %v1869
  %v1875 = vadd.f32 %v1863, %v1869
  %v1876 = vadd.f32 %v1864, %v1869
  %v1877 = vmax.f32 %v1871, 0.0
  %v1878 = vmax.f32 %v1872, 0.0
  %v1879 = vmax.f32 %v1873, 0.0
  %v1880 = vmax.f32 %v1874, 0.0
  %v1881 = vmax.f32 %v1875, 0.0
  %v1882 = vmax.f32 %v1876, 0.0
  %1883 = vst [vmem:[%s3] sm:$0xff] %v1877
  %1884 = vst [vmem:[%s3 + $0x8] sm:$0xff] %v1878
  %1885 = vst [vmem:[%s3 + $0x10] sm:$0xff] %v1879
  %1886 = vst [vmem:[%s3 + $0x18] sm:$0xff] %v1880
  %1887 = vst [vmem:[%s3 + $0x20] sm:$0xff] %v1881
  %1888 = vst [vmem:[%s3 + $0x28] sm:$0xff] %v1882
  // Predicated region
  $region14: #{_lambda_.1} parent=0 // pred_check
    _
  $region15: #{_lambda_.1} parent=0 // pred_check_branch
    %1890 = sbr.rel (0) target = $region17
  $region16: #{_lambda_.1} parent=0 // pred_region
    _
  $region17: #{_lambda_.1} parent=0 // pred_fallthru
    _
  // Predicated region
  $region18: #{_lambda_.1} parent=0 // pred_check
    _
  $region19: #{_lambda_.1} parent=0 // pred_check_branch
    %1892 = sbr.rel (0) target = $region21
  $region20: #{_lambda_.1} parent=0 // pred_region
    _
  $region21: #{_lambda_.1} parent=0 // pred_fallthru
    _

</llo_original>
